<compile_context>
chip_gen: v7x
topology: tpu7x:2x2x1
jax: 0.10.0
libtpu: 0.0.40
codegen_flags: <defaults>
</compile_context>

<pallas_src>
import functools

import jax
import jax.numpy as jnp
from jax import lax
from jax.experimental import pallas as pl
from jax.experimental.pallas import tpu as pltpu

LEAKY_SLOPE = 0.01  # PyTorch nn.LeakyReLU default

# 3x3 tap offsets, row-major (dy outer, dx inner) -- matches the (kh, kw)
# ordering of the repacked weight matrix.
_OFFSETS = tuple((dy, dx) for dy in (-1, 0, 1) for dx in (-1, 0, 1))


def resblock_kernel(x_ref, w1_ref, b1_ref, w2_ref, b2_ref, o_ref,
                    xpad_ref, col_ref, *, H, W, BN):
    """One batch tile (BN elements) per grid step.

    x_ref    : (BN, C, H*W)           input tile (channels on sublanes,
                                      flattened spatial on lanes)
    w1/w2    : (C, 9*C)               conv weights, (Cout, kh*kw*Cin)
    b1/b2    : (C, 1)                 conv biases
    o_ref    : (BN, C, H*W)           output tile
    xpad_ref : (C, H*W + 2*(W+1))     flat zero-halo scratch ('same' padding)
    col_ref  : (9*C, BN*H*W)          im2col scratch (one MXU matmul per conv)
    """
    C = x_ref.shape[1]
    HW = H * W
    PAD = W + 1

    x = x_ref[...].astype(jnp.float32)                    # (BN, C, HW)

    # Column-validity masks for the dx = -1 / +1 taps.  Row (dy) overflow is
    # absorbed by the zero halo of xpad_ref, so no row masks are needed.
    xx = lax.broadcasted_iota(jnp.int32, (1, HW), 1) % W
    col_masks = {-1: xx >= 1, 1: xx <= W - 2}

    # Zero only the halo; the interior is fully overwritten for every tile
    # element below, so the halo stays zero for both convs.
    halo = jnp.zeros((C, PAD), jnp.float32)
    xpad_ref[:, 0:PAD] = halo
    xpad_ref[:, PAD + HW:PAD + HW + PAD] = halo

    def conv3x3(get_src, w_ref, b_ref):
        # 'same'-padded 3x3 conv over the whole tile:
        #   im2col (9C, BN*HW) then ONE matmul (C,9C)x(9C,BN*HW), f32 acc.
        for n in range(BN):                               # static unroll
            xpad_ref[:, PAD:PAD + HW] = get_src(n)        # (C, HW)
            for t, (dy, dx) in enumerate(_OFFSETS):
                start = PAD + dy * W + dx                 # static offset
                tap = xpad_ref[:, start:start + HW]       # (C, HW)
                if dx != 0:
                    tap = jnp.where(col_masks[dx], tap, 0.0)
                col_ref[t * C:(t + 1) * C, n * HW:(n + 1) * HW] = tap
        # NOTE: for realistic C (>=64) cast both operands to bf16 here
        # (keeping f32 accumulation); kept f32 at tiny C where the kernel is
        # overhead bound, to preserve exact parity with the reference.
        return jnp.dot(w_ref[...], col_ref[...],
                       preferred_element_type=jnp.float32) + b_ref[...]

    h = conv3x3(lambda n: x[n], w1_ref, b1_ref)           # (C, BN*HW)
    h = jnp.where(h > 0, h, LEAKY_SLOPE * h)              # LeakyReLU
    y = conv3x3(lambda n: h[:, n * HW:(n + 1) * HW], w2_ref, b2_ref)

    for n in range(BN):                                   # residual + store
        o_ref[n] = (y[:, n * HW:(n + 1) * HW] + x[n]).astype(o_ref.dtype)


def resblock_pallas(x_nchw, w1, b1, w2, b2, *, max_tile_lanes=4096):
    """x_nchw: (N, C, H, W). w1/w2: (3, 3, C, C) HWIO. b1/b2: (C,)."""
    N, C, H, W = x_nchw.shape
    HW = H * W

    # Batch tile: largest divisor of N with <= max_tile_lanes lanes per step,
    # keeping the im2col slab (9C x BN*HW f32) comfortably inside VMEM while
    # amortising per-grid-step overhead.
    BN = 1
    for cand in range(N, 0, -1):
        if N % cand == 0 and cand * HW <= max_tile_lanes:
            BN = cand
            break

    # Free layout plumbing only: contiguous reshape, no pad, no transpose of x.
    x_flat = x_nchw.reshape(N, C, HW)
    # (kh, kw, Cin, Cout) -> (Cout, kh, kw, Cin) -> (Cout, 9*Cin)
    w1_mat = jnp.transpose(w1, (3, 0, 1, 2)).reshape(C, 9 * C)
    w2_mat = jnp.transpose(w2, (3, 0, 1, 2)).reshape(C, 9 * C)
    b1_col = b1.reshape(C, 1)
    b2_col = b2.reshape(C, 1)

    kernel = functools.partial(resblock_kernel, H=H, W=W, BN=BN)

    out_flat = pl.pallas_call(
        kernel,
        out_shape=jax.ShapeDtypeStruct((N, C, HW), x_nchw.dtype),
        grid_spec=pltpu.PrefetchScalarGridSpec(
            num_scalar_prefetch=0,
            grid=(N // BN,),
            in_specs=[
                pl.BlockSpec((BN, C, HW), lambda n: (n, 0, 0)),
                pl.BlockSpec((C, 9 * C), lambda n: (0, 0)),
                pl.BlockSpec((C, 1), lambda n: (0, 0)),
                pl.BlockSpec((C, 9 * C), lambda n: (0, 0)),
                pl.BlockSpec((C, 1), lambda n: (0, 0)),
            ],
            out_specs=pl.BlockSpec((BN, C, HW), lambda n: (n, 0, 0)),
            scratch_shapes=[
                pltpu.VMEM((C, HW + 2 * (W + 1)), jnp.float32),   # halo pad
                pltpu.VMEM((9 * C, BN * HW), jnp.float32),        # im2col
            ],
        ),
        compiler_params=pltpu.CompilerParams(
            dimension_semantics=("parallel",)),
    )(x_flat, w1_mat, b1_col, w2_mat, b2_col)

    return out_flat.reshape(N, C, H, W)


def resblock_reference(x_nchw, w1, b1, w2, b2):
    """Pure-JAX reference (NCHW convs, full f32 precision)."""
    dn = ("NCHW", "HWIO", "NCHW")
    h = lax.conv_general_dilated(x_nchw, w1, (1, 1), "SAME",
                                 dimension_numbers=dn,
                                 precision=lax.Precision.HIGHEST)
    h = h + b1.reshape(1, -1, 1, 1)
    h = jnp.where(h > 0, h, LEAKY_SLOPE * h)
    y = lax.conv_general_dilated(h, w2, (1, 1), "SAME",
                                 dimension_numbers=dn,
                                 precision=lax.Precision.HIGHEST)
    y = y + b2.reshape(1, -1, 1, 1)
    return y + x_nchw


if __name__ == "__main__":
    N, C, H, W = 2, 4, 16, 16

    key = jax.random.PRNGKey(0)
    kx, kw1, kb1, kw2, kb2 = jax.random.split(key, 5)

    x = jax.random.normal(kx, (N, C, H, W), dtype=jnp.float32)
    # Deterministic synthetic parameters (shapes match nn.Conv2d(C, C, 3)).
    w1 = jax.random.normal(kw1, (3, 3, C, C), dtype=jnp.float32) * 0.1
    b1 = jax.random.normal(kb1, (C,), dtype=jnp.float32) * 0.1
    w2 = jax.random.normal(kw2, (3, 3, C, C), dtype=jnp.float32) * 0.1
    b2 = jax.random.normal(kb2, (C,), dtype=jnp.float32) * 0.1

    y = resblock_pallas(x, w1, b1, w2, b2)
    jax.block_until_ready(y)

    y_ref = resblock_reference(x, w1, b1, w2, b2)
    assert y.shape == (N, C, H, W)
    max_err = jnp.max(jnp.abs(y - y_ref))
    assert jnp.allclose(y, y_ref, atol=1e-3, rtol=1e-3), f"mismatch: {max_err}"

    print("KERNEL_OK")
</pallas_src>

<mosaic_0001>
module attributes {stable_mosaic.version = 11 : i64} {
  func.func @resblock_kernel(%arg0: i32, %arg1: memref<2x4x256xf32, #tpu.memory_space<vmem>>, %arg2: memref<4x36xf32, #tpu.memory_space<vmem>>, %arg3: memref<4x1xf32, #tpu.memory_space<vmem>>, %arg4: memref<4x36xf32, #tpu.memory_space<vmem>>, %arg5: memref<4x1xf32, #tpu.memory_space<vmem>>, %arg6: memref<2x4x256xf32, #tpu.memory_space<vmem>>, %arg7: memref<4x290xf32, #tpu.memory_space<vmem>>, %arg8: memref<36x512xf32, #tpu.memory_space<vmem>>) attributes {dimension_semantics = [#tpu.dimension_semantics<parallel>], iteration_bounds = array<i64: 1>, scalar_prefetch = 0 : i64, scratch_operands = 2 : i64, tpu.core_type = #tpu.core_type<tc>, window_params = [{transform_indices = @transform_0, window_bounds = array<i64: 2, 4, 256>}, {pipeline_mode = #tpu.pipeline_mode<synchronous>, transform_indices = @transform_1, window_bounds = array<i64: 4, 36>}, {pipeline_mode = #tpu.pipeline_mode<synchronous>, transform_indices = @transform_2, window_bounds = array<i64: 4, 1>}, {pipeline_mode = #tpu.pipeline_mode<synchronous>, transform_indices = @transform_3, window_bounds = array<i64: 4, 36>}, {pipeline_mode = #tpu.pipeline_mode<synchronous>, transform_indices = @transform_4, window_bounds = array<i64: 4, 1>}, {transform_indices = @transform_5, window_bounds = array<i64: 2, 4, 256>}]} {
    %c0 = arith.constant 0 : index
    %c0_0 = arith.constant 0 : index
    %c0_1 = arith.constant 0 : index
    %0 = vector.load %arg1[%c0, %c0_0, %c0_1] : memref<2x4x256xf32, #tpu.memory_space<vmem>>, vector<2x4x256xf32>
    %1 = tpu.iota {dimensions = array<i32: 1>} : vector<1x256xi32>
    %c16_i32 = arith.constant 16 : i32
    %c0_i32 = arith.constant 0 : i32
    %2 = arith.cmpi eq, %c16_i32, %c0_i32 : i32
    %c1_i32 = arith.constant 1 : i32
    %3 = arith.select %2, %c1_i32, %c16_i32 : i32
    %4 = vector.broadcast %3 : i32 to vector<1x256xi32>
    %5 = arith.remsi %1, %4 : vector<1x256xi32>
    %c0_i32_2 = arith.constant 0 : i32
    %6 = vector.broadcast %c0_i32_2 : i32 to vector<1x256xi32>
    %7 = arith.cmpi ne, %5, %6 : vector<1x256xi32>
    %c0_i32_3 = arith.constant 0 : i32
    %8 = vector.broadcast %c0_i32_3 : i32 to vector<1x256xi32>
    %9 = arith.cmpi slt, %5, %8 : vector<1x256xi32>
    %c0_i32_4 = arith.constant 0 : i32
    %10 = arith.cmpi slt, %3, %c0_i32_4 : i32
    %11 = vector.broadcast %10 : i1 to vector<1x256xi1>
    %12 = vector.broadcast %11 : vector<1x256xi1> to vector<1x256xi1>
    %13 = arith.xori %9, %12 : vector<1x256xi1>
    %14 = arith.andi %13, %7 : vector<1x256xi1>
    %15 = vector.broadcast %3 : i32 to vector<1x256xi32>
    %16 = arith.addi %5, %15 : vector<1x256xi32>
    %17 = arith.select %14, %16, %5 : vector<1x256xi1>, vector<1x256xi32>
    %c1_i32_5 = arith.constant 1 : i32
    %18 = vector.broadcast %c1_i32_5 : i32 to vector<1x256xi32>
    %19 = arith.cmpi sge, %17, %18 : vector<1x256xi32>
    %c14_i32 = arith.constant 14 : i32
    %20 = vector.broadcast %c14_i32 : i32 to vector<1x256xi32>
    %21 = arith.cmpi sle, %17, %20 : vector<1x256xi32>
    %cst = arith.constant 0.000000e+00 : f32
    %22 = vector.broadcast %cst : f32 to vector<4x17xf32>
    %c0_6 = arith.constant 0 : index
    %c0_7 = arith.constant 0 : index
    %23 = vector.load %arg7[%c0_6, %c0_7] : memref<4x290xf32, #tpu.memory_space<vmem>>, vector<4x17xf32>
    tpu.vector_store %arg7[%c0_6, %c0_7], %22 {strides = array<i32>} : memref<4x290xf32, #tpu.memory_space<vmem>>, vector<4x17xf32>,
    %c0_8 = arith.constant 0 : index
    %c273 = arith.constant 273 : index
    %24 = vector.load %arg7[%c0_8, %c273] : memref<4x290xf32, #tpu.memory_space<vmem>>, vector<4x17xf32>
    tpu.vector_store %arg7[%c0_8, %c273], %22 {strides = array<i32>} : memref<4x290xf32, #tpu.memory_space<vmem>>, vector<4x17xf32>,
    %25 = vector.extract_strided_slice %0 {offsets = [0, 0, 0], sizes = [1, 4, 256], strides = [1, 1, 1]} : vector<2x4x256xf32> to vector<1x4x256xf32>
    %26 = vector.shape_cast %25 : vector<1x4x256xf32> to vector<4x256xf32>
    %c0_9 = arith.constant 0 : index
    %c17 = arith.constant 17 : index
    %27 = vector.load %arg7[%c0_9, %c17] : memref<4x290xf32, #tpu.memory_space<vmem>>, vector<4x256xf32>
    tpu.vector_store %arg7[%c0_9, %c17], %26 {strides = array<i32>} : memref<4x290xf32, #tpu.memory_space<vmem>>, vector<4x256xf32>,
    %c0_10 = arith.constant 0 : index
    %c0_11 = arith.constant 0 : index
    %28 = vector.load %arg7[%c0_10, %c0_11] : memref<4x290xf32, #tpu.memory_space<vmem>>, vector<4x256xf32>
    %cst_12 = arith.constant 0.000000e+00 : f32
    %29 = vector.shape_cast %19 : vector<1x256xi1> to vector<1x256xi1>
    %30 = vector.broadcast %29 : vector<1x256xi1> to vector<4x256xi1>
    %31 = vector.broadcast %cst_12 : f32 to vector<4x256xf32>
    %32 = arith.select %30, %28, %31 : vector<4x256xi1>, vector<4x256xf32>
    %c0_13 = arith.constant 0 : index
    %c0_14 = arith.constant 0 : index
    %33 = vector.load %arg8[%c0_13, %c0_14] : memref<36x512xf32, #tpu.memory_space<vmem>>, vector<4x256xf32>
    tpu.vector_store %arg8[%c0_13, %c0_14], %32 {strides = array<i32>} : memref<36x512xf32, #tpu.memory_space<vmem>>, vector<4x256xf32>,
    %c0_15 = arith.constant 0 : index
    %c1 = arith.constant 1 : index
    %34 = vector.load %arg7[%c0_15, %c1] : memref<4x290xf32, #tpu.memory_space<vmem>>, vector<4x256xf32>
    %c4 = arith.constant 4 : index
    %c0_16 = arith.constant 0 : index
    %35 = vector.load %arg8[%c4, %c0_16] : memref<36x512xf32, #tpu.memory_space<vmem>>, vector<4x256xf32>
    tpu.vector_store %arg8[%c4, %c0_16], %34 {strides = array<i32>} : memref<36x512xf32, #tpu.memory_space<vmem>>, vector<4x256xf32>,
    %c0_17 = arith.constant 0 : index
    %c2 = arith.constant 2 : index
    %36 = vector.load %arg7[%c0_17, %c2] : memref<4x290xf32, #tpu.memory_space<vmem>>, vector<4x256xf32>
    %cst_18 = arith.constant 0.000000e+00 : f32
    %37 = vector.shape_cast %21 : vector<1x256xi1> to vector<1x256xi1>
    %38 = vector.broadcast %37 : vector<1x256xi1> to vector<4x256xi1>
    %39 = vector.broadcast %cst_18 : f32 to vector<4x256xf32>
    %40 = arith.select %38, %36, %39 : vector<4x256xi1>, vector<4x256xf32>
    %c8 = arith.constant 8 : index
    %c0_19 = arith.constant 0 : index
    %41 = vector.load %arg8[%c8, %c0_19] : memref<36x512xf32, #tpu.memory_space<vmem>>, vector<4x256xf32>
    tpu.vector_store %arg8[%c8, %c0_19], %40 {strides = array<i32>} : memref<36x512xf32, #tpu.memory_space<vmem>>, vector<4x256xf32>,
    %c0_20 = arith.constant 0 : index
    %c16 = arith.constant 16 : index
    %42 = vector.load %arg7[%c0_20, %c16] : memref<4x290xf32, #tpu.memory_space<vmem>>, vector<4x256xf32>
    %cst_21 = arith.constant 0.000000e+00 : f32
    %43 = vector.shape_cast %19 : vector<1x256xi1> to vector<1x256xi1>
    %44 = vector.broadcast %43 : vector<1x256xi1> to vector<4x256xi1>
    %45 = vector.broadcast %cst_21 : f32 to vector<4x256xf32>
    %46 = arith.select %44, %42, %45 : vector<4x256xi1>, vector<4x256xf32>
    %c12 = arith.constant 12 : index
    %c0_22 = arith.constant 0 : index
    %47 = vector.load %arg8[%c12, %c0_22] : memref<36x512xf32, #tpu.memory_space<vmem>>, vector<4x256xf32>
    tpu.vector_store %arg8[%c12, %c0_22], %46 {strides = array<i32>} : memref<36x512xf32, #tpu.memory_space<vmem>>, vector<4x256xf32>,
    %c0_23 = arith.constant 0 : index
    %c17_24 = arith.constant 17 : index
    %48 = vector.load %arg7[%c0_23, %c17_24] : memref<4x290xf32, #tpu.memory_space<vmem>>, vector<4x256xf32>
    %c16_25 = arith.constant 16 : index
    %c0_26 = arith.constant 0 : index
    %49 = vector.load %arg8[%c16_25, %c0_26] : memref<36x512xf32, #tpu.memory_space<vmem>>, vector<4x256xf32>
    tpu.vector_store %arg8[%c16_25, %c0_26], %48 {strides = array<i32>} : memref<36x512xf32, #tpu.memory_space<vmem>>, vector<4x256xf32>,
    %c0_27 = arith.constant 0 : index
    %c18 = arith.constant 18 : index
    %50 = vector.load %arg7[%c0_27, %c18] : memref<4x290xf32, #tpu.memory_space<vmem>>, vector<4x256xf32>
    %cst_28 = arith.constant 0.000000e+00 : f32
    %51 = vector.shape_cast %21 : vector<1x256xi1> to vector<1x256xi1>
    %52 = vector.broadcast %51 : vector<1x256xi1> to vector<4x256xi1>
    %53 = vector.broadcast %cst_28 : f32 to vector<4x256xf32>
    %54 = arith.select %52, %50, %53 : vector<4x256xi1>, vector<4x256xf32>
    %c20 = arith.constant 20 : index
    %c0_29 = arith.constant 0 : index
    %55 = vector.load %arg8[%c20, %c0_29] : memref<36x512xf32, #tpu.memory_space<vmem>>, vector<4x256xf32>
    tpu.vector_store %arg8[%c20, %c0_29], %54 {strides = array<i32>} : memref<36x512xf32, #tpu.memory_space<vmem>>, vector<4x256xf32>,
    %c0_30 = arith.constant 0 : index
    %c32 = arith.constant 32 : index
    %56 = vector.load %arg7[%c0_30, %c32] : memref<4x290xf32, #tpu.memory_space<vmem>>, vector<4x256xf32>
    %cst_31 = arith.constant 0.000000e+00 : f32
    %57 = vector.shape_cast %19 : vector<1x256xi1> to vector<1x256xi1>
    %58 = vector.broadcast %57 : vector<1x256xi1> to vector<4x256xi1>
    %59 = vector.broadcast %cst_31 : f32 to vector<4x256xf32>
    %60 = arith.select %58, %56, %59 : vector<4x256xi1>, vector<4x256xf32>
    %c24 = arith.constant 24 : index
    %c0_32 = arith.constant 0 : index
    %61 = vector.load %arg8[%c24, %c0_32] : memref<36x512xf32, #tpu.memory_space<vmem>>, vector<4x256xf32>
    tpu.vector_store %arg8[%c24, %c0_32], %60 {strides = array<i32>} : memref<36x512xf32, #tpu.memory_space<vmem>>, vector<4x256xf32>,
    %c0_33 = arith.constant 0 : index
    %c33 = arith.constant 33 : index
    %62 = vector.load %arg7[%c0_33, %c33] : memref<4x290xf32, #tpu.memory_space<vmem>>, vector<4x256xf32>
    %c28 = arith.constant 28 : index
    %c0_34 = arith.constant 0 : index
    %63 = vector.load %arg8[%c28, %c0_34] : memref<36x512xf32, #tpu.memory_space<vmem>>, vector<4x256xf32>
    tpu.vector_store %arg8[%c28, %c0_34], %62 {strides = array<i32>} : memref<36x512xf32, #tpu.memory_space<vmem>>, vector<4x256xf32>,
    %c0_35 = arith.constant 0 : index
    %c34 = arith.constant 34 : index
    %64 = vector.load %arg7[%c0_35, %c34] : memref<4x290xf32, #tpu.memory_space<vmem>>, vector<4x256xf32>
    %cst_36 = arith.constant 0.000000e+00 : f32
    %65 = vector.shape_cast %21 : vector<1x256xi1> to vector<1x256xi1>
    %66 = vector.broadcast %65 : vector<1x256xi1> to vector<4x256xi1>
    %67 = vector.broadcast %cst_36 : f32 to vector<4x256xf32>
    %68 = arith.select %66, %64, %67 : vector<4x256xi1>, vector<4x256xf32>
    %c32_37 = arith.constant 32 : index
    %c0_38 = arith.constant 0 : index
    %69 = vector.load %arg8[%c32_37, %c0_38] : memref<36x512xf32, #tpu.memory_space<vmem>>, vector<4x256xf32>
    tpu.vector_store %arg8[%c32_37, %c0_38], %68 {strides = array<i32>} : memref<36x512xf32, #tpu.memory_space<vmem>>, vector<4x256xf32>,
    %70 = vector.extract_strided_slice %0 {offsets = [1, 0, 0], sizes = [1, 4, 256], strides = [1, 1, 1]} : vector<2x4x256xf32> to vector<1x4x256xf32>
    %71 = vector.shape_cast %70 : vector<1x4x256xf32> to vector<4x256xf32>
    %c0_39 = arith.constant 0 : index
    %c17_40 = arith.constant 17 : index
    %72 = vector.load %arg7[%c0_39, %c17_40] : memref<4x290xf32, #tpu.memory_space<vmem>>, vector<4x256xf32>
    tpu.vector_store %arg7[%c0_39, %c17_40], %71 {strides = array<i32>} : memref<4x290xf32, #tpu.memory_space<vmem>>, vector<4x256xf32>,
    %c0_41 = arith.constant 0 : index
    %c0_42 = arith.constant 0 : index
    %73 = vector.load %arg7[%c0_41, %c0_42] : memref<4x290xf32, #tpu.memory_space<vmem>>, vector<4x256xf32>
    %cst_43 = arith.constant 0.000000e+00 : f32
    %74 = vector.shape_cast %19 : vector<1x256xi1> to vector<1x256xi1>
    %75 = vector.broadcast %74 : vector<1x256xi1> to vector<4x256xi1>
    %76 = vector.broadcast %cst_43 : f32 to vector<4x256xf32>
    %77 = arith.select %75, %73, %76 : vector<4x256xi1>, vector<4x256xf32>
    %c0_44 = arith.constant 0 : index
    %c256 = arith.constant 256 : index
    %78 = vector.load %arg8[%c0_44, %c256] : memref<36x512xf32, #tpu.memory_space<vmem>>, vector<4x256xf32>
    tpu.vector_store %arg8[%c0_44, %c256], %77 {strides = array<i32>} : memref<36x512xf32, #tpu.memory_space<vmem>>, vector<4x256xf32>,
    %c0_45 = arith.constant 0 : index
    %c1_46 = arith.constant 1 : index
    %79 = vector.load %arg7[%c0_45, %c1_46] : memref<4x290xf32, #tpu.memory_space<vmem>>, vector<4x256xf32>
    %c4_47 = arith.constant 4 : index
    %c256_48 = arith.constant 256 : index
    %80 = vector.load %arg8[%c4_47, %c256_48] : memref<36x512xf32, #tpu.memory_space<vmem>>, vector<4x256xf32>
    tpu.vector_store %arg8[%c4_47, %c256_48], %79 {strides = array<i32>} : memref<36x512xf32, #tpu.memory_space<vmem>>, vector<4x256xf32>,
    %c0_49 = arith.constant 0 : index
    %c2_50 = arith.constant 2 : index
    %81 = vector.load %arg7[%c0_49, %c2_50] : memref<4x290xf32, #tpu.memory_space<vmem>>, vector<4x256xf32>
    %cst_51 = arith.constant 0.000000e+00 : f32
    %82 = vector.shape_cast %21 : vector<1x256xi1> to vector<1x256xi1>
    %83 = vector.broadcast %82 : vector<1x256xi1> to vector<4x256xi1>
    %84 = vector.broadcast %cst_51 : f32 to vector<4x256xf32>
    %85 = arith.select %83, %81, %84 : vector<4x256xi1>, vector<4x256xf32>
    %c8_52 = arith.constant 8 : index
    %c256_53 = arith.constant 256 : index
    %86 = vector.load %arg8[%c8_52, %c256_53] : memref<36x512xf32, #tpu.memory_space<vmem>>, vector<4x256xf32>
    tpu.vector_store %arg8[%c8_52, %c256_53], %85 {strides = array<i32>} : memref<36x512xf32, #tpu.memory_space<vmem>>, vector<4x256xf32>,
    %c0_54 = arith.constant 0 : index
    %c16_55 = arith.constant 16 : index
    %87 = vector.load %arg7[%c0_54, %c16_55] : memref<4x290xf32, #tpu.memory_space<vmem>>, vector<4x256xf32>
    %cst_56 = arith.constant 0.000000e+00 : f32
    %88 = vector.shape_cast %19 : vector<1x256xi1> to vector<1x256xi1>
    %89 = vector.broadcast %88 : vector<1x256xi1> to vector<4x256xi1>
    %90 = vector.broadcast %cst_56 : f32 to vector<4x256xf32>
    %91 = arith.select %89, %87, %90 : vector<4x256xi1>, vector<4x256xf32>
    %c12_57 = arith.constant 12 : index
    %c256_58 = arith.constant 256 : index
    %92 = vector.load %arg8[%c12_57, %c256_58] : memref<36x512xf32, #tpu.memory_space<vmem>>, vector<4x256xf32>
    tpu.vector_store %arg8[%c12_57, %c256_58], %91 {strides = array<i32>} : memref<36x512xf32, #tpu.memory_space<vmem>>, vector<4x256xf32>,
    %c0_59 = arith.constant 0 : index
    %c17_60 = arith.constant 17 : index
    %93 = vector.load %arg7[%c0_59, %c17_60] : memref<4x290xf32, #tpu.memory_space<vmem>>, vector<4x256xf32>
    %c16_61 = arith.constant 16 : index
    %c256_62 = arith.constant 256 : index
    %94 = vector.load %arg8[%c16_61, %c256_62] : memref<36x512xf32, #tpu.memory_space<vmem>>, vector<4x256xf32>
    tpu.vector_store %arg8[%c16_61, %c256_62], %93 {strides = array<i32>} : memref<36x512xf32, #tpu.memory_space<vmem>>, vector<4x256xf32>,
    %c0_63 = arith.constant 0 : index
    %c18_64 = arith.constant 18 : index
    %95 = vector.load %arg7[%c0_63, %c18_64] : memref<4x290xf32, #tpu.memory_space<vmem>>, vector<4x256xf32>
    %cst_65 = arith.constant 0.000000e+00 : f32
    %96 = vector.shape_cast %21 : vector<1x256xi1> to vector<1x256xi1>
    %97 = vector.broadcast %96 : vector<1x256xi1> to vector<4x256xi1>
    %98 = vector.broadcast %cst_65 : f32 to vector<4x256xf32>
    %99 = arith.select %97, %95, %98 : vector<4x256xi1>, vector<4x256xf32>
    %c20_66 = arith.constant 20 : index
    %c256_67 = arith.constant 256 : index
    %100 = vector.load %arg8[%c20_66, %c256_67] : memref<36x512xf32, #tpu.memory_space<vmem>>, vector<4x256xf32>
    tpu.vector_store %arg8[%c20_66, %c256_67], %99 {strides = array<i32>} : memref<36x512xf32, #tpu.memory_space<vmem>>, vector<4x256xf32>,
    %c0_68 = arith.constant 0 : index
    %c32_69 = arith.constant 32 : index
    %101 = vector.load %arg7[%c0_68, %c32_69] : memref<4x290xf32, #tpu.memory_space<vmem>>, vector<4x256xf32>
    %cst_70 = arith.constant 0.000000e+00 : f32
    %102 = vector.shape_cast %19 : vector<1x256xi1> to vector<1x256xi1>
    %103 = vector.broadcast %102 : vector<1x256xi1> to vector<4x256xi1>
    %104 = vector.broadcast %cst_70 : f32 to vector<4x256xf32>
    %105 = arith.select %103, %101, %104 : vector<4x256xi1>, vector<4x256xf32>
    %c24_71 = arith.constant 24 : index
    %c256_72 = arith.constant 256 : index
    %106 = vector.load %arg8[%c24_71, %c256_72] : memref<36x512xf32, #tpu.memory_space<vmem>>, vector<4x256xf32>
    tpu.vector_store %arg8[%c24_71, %c256_72], %105 {strides = array<i32>} : memref<36x512xf32, #tpu.memory_space<vmem>>, vector<4x256xf32>,
    %c0_73 = arith.constant 0 : index
    %c33_74 = arith.constant 33 : index
    %107 = vector.load %arg7[%c0_73, %c33_74] : memref<4x290xf32, #tpu.memory_space<vmem>>, vector<4x256xf32>
    %c28_75 = arith.constant 28 : index
    %c256_76 = arith.constant 256 : index
    %108 = vector.load %arg8[%c28_75, %c256_76] : memref<36x512xf32, #tpu.memory_space<vmem>>, vector<4x256xf32>
    tpu.vector_store %arg8[%c28_75, %c256_76], %107 {strides = array<i32>} : memref<36x512xf32, #tpu.memory_space<vmem>>, vector<4x256xf32>,
    %c0_77 = arith.constant 0 : index
    %c34_78 = arith.constant 34 : index
    %109 = vector.load %arg7[%c0_77, %c34_78] : memref<4x290xf32, #tpu.memory_space<vmem>>, vector<4x256xf32>
    %cst_79 = arith.constant 0.000000e+00 : f32
    %110 = vector.shape_cast %21 : vector<1x256xi1> to vector<1x256xi1>
    %111 = vector.broadcast %110 : vector<1x256xi1> to vector<4x256xi1>
    %112 = vector.broadcast %cst_79 : f32 to vector<4x256xf32>
    %113 = arith.select %111, %109, %112 : vector<4x256xi1>, vector<4x256xf32>
    %c32_80 = arith.constant 32 : index
    %c256_81 = arith.constant 256 : index
    %114 = vector.load %arg8[%c32_80, %c256_81] : memref<36x512xf32, #tpu.memory_space<vmem>>, vector<4x256xf32>
    tpu.vector_store %arg8[%c32_80, %c256_81], %113 {strides = array<i32>} : memref<36x512xf32, #tpu.memory_space<vmem>>, vector<4x256xf32>,
    %c0_82 = arith.constant 0 : index
    %c0_83 = arith.constant 0 : index
    %115 = vector.load %arg2[%c0_82, %c0_83] : memref<4x36xf32, #tpu.memory_space<vmem>>, vector<4x36xf32>
    %c0_84 = arith.constant 0 : index
    %c0_85 = arith.constant 0 : index
    %116 = vector.load %arg8[%c0_84, %c0_85] : memref<36x512xf32, #tpu.memory_space<vmem>>, vector<36x512xf32>
    %cst_86 = arith.constant dense<0.000000e+00> : vector<4x512xf32>
    %117 = tpu.matmul %115, %116, %cst_86 {dimension_numbers = #tpu.dot_dimension_numbers<[1], [0], [0], [1], [0, 0, 1, 1], [], []>} : vector<4x36xf32>, vector<36x512xf32>, vector<4x512xf32> -> vector<4x512xf32>
    %c0_87 = arith.constant 0 : index
    %c0_88 = arith.constant 0 : index
    %118 = vector.load %arg3[%c0_87, %c0_88] : memref<4x1xf32, #tpu.memory_space<vmem>>, vector<4x1xf32>
    %119 = vector.broadcast %118 : vector<4x1xf32> to vector<4x512xf32>
    %120 = arith.addf %117, %119 : vector<4x512xf32>
    %cst_89 = arith.constant 0.000000e+00 : f32
    %121 = vector.broadcast %cst_89 : f32 to vector<4x512xf32>
    %122 = arith.cmpf ogt, %120, %121 : vector<4x512xf32>
    %cst_90 = arith.constant 0.00999999977 : f32
    %123 = vector.broadcast %cst_90 : f32 to vector<4x512xf32>
    %124 = arith.mulf %123, %120 : vector<4x512xf32>
    %125 = arith.select %122, %120, %124 : vector<4x512xi1>, vector<4x512xf32>
    %126 = vector.extract_strided_slice %125 {offsets = [0, 0], sizes = [4, 256], strides = [1, 1]} : vector<4x512xf32> to vector<4x256xf32>
    %c0_91 = arith.constant 0 : index
    %c17_92 = arith.constant 17 : index
    %127 = vector.load %arg7[%c0_91, %c17_92] : memref<4x290xf32, #tpu.memory_space<vmem>>, vector<4x256xf32>
    tpu.vector_store %arg7[%c0_91, %c17_92], %126 {strides = array<i32>} : memref<4x290xf32, #tpu.memory_space<vmem>>, vector<4x256xf32>,
    %c0_93 = arith.constant 0 : index
    %c0_94 = arith.constant 0 : index
    %128 = vector.load %arg7[%c0_93, %c0_94] : memref<4x290xf32, #tpu.memory_space<vmem>>, vector<4x256xf32>
    %cst_95 = arith.constant 0.000000e+00 : f32
    %129 = vector.shape_cast %19 : vector<1x256xi1> to vector<1x256xi1>
    %130 = vector.broadcast %129 : vector<1x256xi1> to vector<4x256xi1>
    %131 = vector.broadcast %cst_95 : f32 to vector<4x256xf32>
    %132 = arith.select %130, %128, %131 : vector<4x256xi1>, vector<4x256xf32>
    %c0_96 = arith.constant 0 : index
    %c0_97 = arith.constant 0 : index
    %133 = vector.load %arg8[%c0_96, %c0_97] : memref<36x512xf32, #tpu.memory_space<vmem>>, vector<4x256xf32>
    tpu.vector_store %arg8[%c0_96, %c0_97], %132 {strides = array<i32>} : memref<36x512xf32, #tpu.memory_space<vmem>>, vector<4x256xf32>,
    %c0_98 = arith.constant 0 : index
    %c1_99 = arith.constant 1 : index
    %134 = vector.load %arg7[%c0_98, %c1_99] : memref<4x290xf32, #tpu.memory_space<vmem>>, vector<4x256xf32>
    %c4_100 = arith.constant 4 : index
    %c0_101 = arith.constant 0 : index
    %135 = vector.load %arg8[%c4_100, %c0_101] : memref<36x512xf32, #tpu.memory_space<vmem>>, vector<4x256xf32>
    tpu.vector_store %arg8[%c4_100, %c0_101], %134 {strides = array<i32>} : memref<36x512xf32, #tpu.memory_space<vmem>>, vector<4x256xf32>,
    %c0_102 = arith.constant 0 : index
    %c2_103 = arith.constant 2 : index
    %136 = vector.load %arg7[%c0_102, %c2_103] : memref<4x290xf32, #tpu.memory_space<vmem>>, vector<4x256xf32>
    %cst_104 = arith.constant 0.000000e+00 : f32
    %137 = vector.shape_cast %21 : vector<1x256xi1> to vector<1x256xi1>
    %138 = vector.broadcast %137 : vector<1x256xi1> to vector<4x256xi1>
    %139 = vector.broadcast %cst_104 : f32 to vector<4x256xf32>
    %140 = arith.select %138, %136, %139 : vector<4x256xi1>, vector<4x256xf32>
    %c8_105 = arith.constant 8 : index
    %c0_106 = arith.constant 0 : index
    %141 = vector.load %arg8[%c8_105, %c0_106] : memref<36x512xf32, #tpu.memory_space<vmem>>, vector<4x256xf32>
    tpu.vector_store %arg8[%c8_105, %c0_106], %140 {strides = array<i32>} : memref<36x512xf32, #tpu.memory_space<vmem>>, vector<4x256xf32>,
    %c0_107 = arith.constant 0 : index
    %c16_108 = arith.constant 16 : index
    %142 = vector.load %arg7[%c0_107, %c16_108] : memref<4x290xf32, #tpu.memory_space<vmem>>, vector<4x256xf32>
    %cst_109 = arith.constant 0.000000e+00 : f32
    %143 = vector.shape_cast %19 : vector<1x256xi1> to vector<1x256xi1>
    %144 = vector.broadcast %143 : vector<1x256xi1> to vector<4x256xi1>
    %145 = vector.broadcast %cst_109 : f32 to vector<4x256xf32>
    %146 = arith.select %144, %142, %145 : vector<4x256xi1>, vector<4x256xf32>
    %c12_110 = arith.constant 12 : index
    %c0_111 = arith.constant 0 : index
    %147 = vector.load %arg8[%c12_110, %c0_111] : memref<36x512xf32, #tpu.memory_space<vmem>>, vector<4x256xf32>
    tpu.vector_store %arg8[%c12_110, %c0_111], %146 {strides = array<i32>} : memref<36x512xf32, #tpu.memory_space<vmem>>, vector<4x256xf32>,
    %c0_112 = arith.constant 0 : index
    %c17_113 = arith.constant 17 : index
    %148 = vector.load %arg7[%c0_112, %c17_113] : memref<4x290xf32, #tpu.memory_space<vmem>>, vector<4x256xf32>
    %c16_114 = arith.constant 16 : index
    %c0_115 = arith.constant 0 : index
    %149 = vector.load %arg8[%c16_114, %c0_115] : memref<36x512xf32, #tpu.memory_space<vmem>>, vector<4x256xf32>
    tpu.vector_store %arg8[%c16_114, %c0_115], %148 {strides = array<i32>} : memref<36x512xf32, #tpu.memory_space<vmem>>, vector<4x256xf32>,
    %c0_116 = arith.constant 0 : index
    %c18_117 = arith.constant 18 : index
    %150 = vector.load %arg7[%c0_116, %c18_117] : memref<4x290xf32, #tpu.memory_space<vmem>>, vector<4x256xf32>
    %cst_118 = arith.constant 0.000000e+00 : f32
    %151 = vector.shape_cast %21 : vector<1x256xi1> to vector<1x256xi1>
    %152 = vector.broadcast %151 : vector<1x256xi1> to vector<4x256xi1>
    %153 = vector.broadcast %cst_118 : f32 to vector<4x256xf32>
    %154 = arith.select %152, %150, %153 : vector<4x256xi1>, vector<4x256xf32>
    %c20_119 = arith.constant 20 : index
    %c0_120 = arith.constant 0 : index
    %155 = vector.load %arg8[%c20_119, %c0_120] : memref<36x512xf32, #tpu.memory_space<vmem>>, vector<4x256xf32>
    tpu.vector_store %arg8[%c20_119, %c0_120], %154 {strides = array<i32>} : memref<36x512xf32, #tpu.memory_space<vmem>>, vector<4x256xf32>,
    %c0_121 = arith.constant 0 : index
    %c32_122 = arith.constant 32 : index
    %156 = vector.load %arg7[%c0_121, %c32_122] : memref<4x290xf32, #tpu.memory_space<vmem>>, vector<4x256xf32>
    %cst_123 = arith.constant 0.000000e+00 : f32
    %157 = vector.shape_cast %19 : vector<1x256xi1> to vector<1x256xi1>
    %158 = vector.broadcast %157 : vector<1x256xi1> to vector<4x256xi1>
    %159 = vector.broadcast %cst_123 : f32 to vector<4x256xf32>
    %160 = arith.select %158, %156, %159 : vector<4x256xi1>, vector<4x256xf32>
    %c24_124 = arith.constant 24 : index
    %c0_125 = arith.constant 0 : index
    %161 = vector.load %arg8[%c24_124, %c0_125] : memref<36x512xf32, #tpu.memory_space<vmem>>, vector<4x256xf32>
    tpu.vector_store %arg8[%c24_124, %c0_125], %160 {strides = array<i32>} : memref<36x512xf32, #tpu.memory_space<vmem>>, vector<4x256xf32>,
    %c0_126 = arith.constant 0 : index
    %c33_127 = arith.constant 33 : index
    %162 = vector.load %arg7[%c0_126, %c33_127] : memref<4x290xf32, #tpu.memory_space<vmem>>, vector<4x256xf32>
    %c28_128 = arith.constant 28 : index
    %c0_129 = arith.constant 0 : index
    %163 = vector.load %arg8[%c28_128, %c0_129] : memref<36x512xf32, #tpu.memory_space<vmem>>, vector<4x256xf32>
    tpu.vector_store %arg8[%c28_128, %c0_129], %162 {strides = array<i32>} : memref<36x512xf32, #tpu.memory_space<vmem>>, vector<4x256xf32>,
    %c0_130 = arith.constant 0 : index
    %c34_131 = arith.constant 34 : index
    %164 = vector.load %arg7[%c0_130, %c34_131] : memref<4x290xf32, #tpu.memory_space<vmem>>, vector<4x256xf32>
    %cst_132 = arith.constant 0.000000e+00 : f32
    %165 = vector.shape_cast %21 : vector<1x256xi1> to vector<1x256xi1>
    %166 = vector.broadcast %165 : vector<1x256xi1> to vector<4x256xi1>
    %167 = vector.broadcast %cst_132 : f32 to vector<4x256xf32>
    %168 = arith.select %166, %164, %167 : vector<4x256xi1>, vector<4x256xf32>
    %c32_133 = arith.constant 32 : index
    %c0_134 = arith.constant 0 : index
    %169 = vector.load %arg8[%c32_133, %c0_134] : memref<36x512xf32, #tpu.memory_space<vmem>>, vector<4x256xf32>
    tpu.vector_store %arg8[%c32_133, %c0_134], %168 {strides = array<i32>} : memref<36x512xf32, #tpu.memory_space<vmem>>, vector<4x256xf32>,
    %170 = vector.extract_strided_slice %125 {offsets = [0, 256], sizes = [4, 256], strides = [1, 1]} : vector<4x512xf32> to vector<4x256xf32>
    %c0_135 = arith.constant 0 : index
    %c17_136 = arith.constant 17 : index
    %171 = vector.load %arg7[%c0_135, %c17_136] : memref<4x290xf32, #tpu.memory_space<vmem>>, vector<4x256xf32>
    tpu.vector_store %arg7[%c0_135, %c17_136], %170 {strides = array<i32>} : memref<4x290xf32, #tpu.memory_space<vmem>>, vector<4x256xf32>,
    %c0_137 = arith.constant 0 : index
    %c0_138 = arith.constant 0 : index
    %172 = vector.load %arg7[%c0_137, %c0_138] : memref<4x290xf32, #tpu.memory_space<vmem>>, vector<4x256xf32>
    %cst_139 = arith.constant 0.000000e+00 : f32
    %173 = vector.shape_cast %19 : vector<1x256xi1> to vector<1x256xi1>
    %174 = vector.broadcast %173 : vector<1x256xi1> to vector<4x256xi1>
    %175 = vector.broadcast %cst_139 : f32 to vector<4x256xf32>
    %176 = arith.select %174, %172, %175 : vector<4x256xi1>, vector<4x256xf32>
    %c0_140 = arith.constant 0 : index
    %c256_141 = arith.constant 256 : index
    %177 = vector.load %arg8[%c0_140, %c256_141] : memref<36x512xf32, #tpu.memory_space<vmem>>, vector<4x256xf32>
    tpu.vector_store %arg8[%c0_140, %c256_141], %176 {strides = array<i32>} : memref<36x512xf32, #tpu.memory_space<vmem>>, vector<4x256xf32>,
    %c0_142 = arith.constant 0 : index
    %c1_143 = arith.constant 1 : index
    %178 = vector.load %arg7[%c0_142, %c1_143] : memref<4x290xf32, #tpu.memory_space<vmem>>, vector<4x256xf32>
    %c4_144 = arith.constant 4 : index
    %c256_145 = arith.constant 256 : index
    %179 = vector.load %arg8[%c4_144, %c256_145] : memref<36x512xf32, #tpu.memory_space<vmem>>, vector<4x256xf32>
    tpu.vector_store %arg8[%c4_144, %c256_145], %178 {strides = array<i32>} : memref<36x512xf32, #tpu.memory_space<vmem>>, vector<4x256xf32>,
    %c0_146 = arith.constant 0 : index
    %c2_147 = arith.constant 2 : index
    %180 = vector.load %arg7[%c0_146, %c2_147] : memref<4x290xf32, #tpu.memory_space<vmem>>, vector<4x256xf32>
    %cst_148 = arith.constant 0.000000e+00 : f32
    %181 = vector.shape_cast %21 : vector<1x256xi1> to vector<1x256xi1>
    %182 = vector.broadcast %181 : vector<1x256xi1> to vector<4x256xi1>
    %183 = vector.broadcast %cst_148 : f32 to vector<4x256xf32>
    %184 = arith.select %182, %180, %183 : vector<4x256xi1>, vector<4x256xf32>
    %c8_149 = arith.constant 8 : index
    %c256_150 = arith.constant 256 : index
    %185 = vector.load %arg8[%c8_149, %c256_150] : memref<36x512xf32, #tpu.memory_space<vmem>>, vector<4x256xf32>
    tpu.vector_store %arg8[%c8_149, %c256_150], %184 {strides = array<i32>} : memref<36x512xf32, #tpu.memory_space<vmem>>, vector<4x256xf32>,
    %c0_151 = arith.constant 0 : index
    %c16_152 = arith.constant 16 : index
    %186 = vector.load %arg7[%c0_151, %c16_152] : memref<4x290xf32, #tpu.memory_space<vmem>>, vector<4x256xf32>
    %cst_153 = arith.constant 0.000000e+00 : f32
    %187 = vector.shape_cast %19 : vector<1x256xi1> to vector<1x256xi1>
    %188 = vector.broadcast %187 : vector<1x256xi1> to vector<4x256xi1>
    %189 = vector.broadcast %cst_153 : f32 to vector<4x256xf32>
    %190 = arith.select %188, %186, %189 : vector<4x256xi1>, vector<4x256xf32>
    %c12_154 = arith.constant 12 : index
    %c256_155 = arith.constant 256 : index
    %191 = vector.load %arg8[%c12_154, %c256_155] : memref<36x512xf32, #tpu.memory_space<vmem>>, vector<4x256xf32>
    tpu.vector_store %arg8[%c12_154, %c256_155], %190 {strides = array<i32>} : memref<36x512xf32, #tpu.memory_space<vmem>>, vector<4x256xf32>,
    %c0_156 = arith.constant 0 : index
    %c17_157 = arith.constant 17 : index
    %192 = vector.load %arg7[%c0_156, %c17_157] : memref<4x290xf32, #tpu.memory_space<vmem>>, vector<4x256xf32>
    %c16_158 = arith.constant 16 : index
    %c256_159 = arith.constant 256 : index
    %193 = vector.load %arg8[%c16_158, %c256_159] : memref<36x512xf32, #tpu.memory_space<vmem>>, vector<4x256xf32>
    tpu.vector_store %arg8[%c16_158, %c256_159], %192 {strides = array<i32>} : memref<36x512xf32, #tpu.memory_space<vmem>>, vector<4x256xf32>,
    %c0_160 = arith.constant 0 : index
    %c18_161 = arith.constant 18 : index
    %194 = vector.load %arg7[%c0_160, %c18_161] : memref<4x290xf32, #tpu.memory_space<vmem>>, vector<4x256xf32>
    %cst_162 = arith.constant 0.000000e+00 : f32
    %195 = vector.shape_cast %21 : vector<1x256xi1> to vector<1x256xi1>
    %196 = vector.broadcast %195 : vector<1x256xi1> to vector<4x256xi1>
    %197 = vector.broadcast %cst_162 : f32 to vector<4x256xf32>
    %198 = arith.select %196, %194, %197 : vector<4x256xi1>, vector<4x256xf32>
    %c20_163 = arith.constant 20 : index
    %c256_164 = arith.constant 256 : index
    %199 = vector.load %arg8[%c20_163, %c256_164] : memref<36x512xf32, #tpu.memory_space<vmem>>, vector<4x256xf32>
    tpu.vector_store %arg8[%c20_163, %c256_164], %198 {strides = array<i32>} : memref<36x512xf32, #tpu.memory_space<vmem>>, vector<4x256xf32>,
    %c0_165 = arith.constant 0 : index
    %c32_166 = arith.constant 32 : index
    %200 = vector.load %arg7[%c0_165, %c32_166] : memref<4x290xf32, #tpu.memory_space<vmem>>, vector<4x256xf32>
    %cst_167 = arith.constant 0.000000e+00 : f32
    %201 = vector.shape_cast %19 : vector<1x256xi1> to vector<1x256xi1>
    %202 = vector.broadcast %201 : vector<1x256xi1> to vector<4x256xi1>
    %203 = vector.broadcast %cst_167 : f32 to vector<4x256xf32>
    %204 = arith.select %202, %200, %203 : vector<4x256xi1>, vector<4x256xf32>
    %c24_168 = arith.constant 24 : index
    %c256_169 = arith.constant 256 : index
    %205 = vector.load %arg8[%c24_168, %c256_169] : memref<36x512xf32, #tpu.memory_space<vmem>>, vector<4x256xf32>
    tpu.vector_store %arg8[%c24_168, %c256_169], %204 {strides = array<i32>} : memref<36x512xf32, #tpu.memory_space<vmem>>, vector<4x256xf32>,
    %c0_170 = arith.constant 0 : index
    %c33_171 = arith.constant 33 : index
    %206 = vector.load %arg7[%c0_170, %c33_171] : memref<4x290xf32, #tpu.memory_space<vmem>>, vector<4x256xf32>
    %c28_172 = arith.constant 28 : index
    %c256_173 = arith.constant 256 : index
    %207 = vector.load %arg8[%c28_172, %c256_173] : memref<36x512xf32, #tpu.memory_space<vmem>>, vector<4x256xf32>
    tpu.vector_store %arg8[%c28_172, %c256_173], %206 {strides = array<i32>} : memref<36x512xf32, #tpu.memory_space<vmem>>, vector<4x256xf32>,
    %c0_174 = arith.constant 0 : index
    %c34_175 = arith.constant 34 : index
    %208 = vector.load %arg7[%c0_174, %c34_175] : memref<4x290xf32, #tpu.memory_space<vmem>>, vector<4x256xf32>
    %cst_176 = arith.constant 0.000000e+00 : f32
    %209 = vector.shape_cast %21 : vector<1x256xi1> to vector<1x256xi1>
    %210 = vector.broadcast %209 : vector<1x256xi1> to vector<4x256xi1>
    %211 = vector.broadcast %cst_176 : f32 to vector<4x256xf32>
    %212 = arith.select %210, %208, %211 : vector<4x256xi1>, vector<4x256xf32>
    %c32_177 = arith.constant 32 : index
    %c256_178 = arith.constant 256 : index
    %213 = vector.load %arg8[%c32_177, %c256_178] : memref<36x512xf32, #tpu.memory_space<vmem>>, vector<4x256xf32>
    tpu.vector_store %arg8[%c32_177, %c256_178], %212 {strides = array<i32>} : memref<36x512xf32, #tpu.memory_space<vmem>>, vector<4x256xf32>,
    %c0_179 = arith.constant 0 : index
    %c0_180 = arith.constant 0 : index
    %214 = vector.load %arg4[%c0_179, %c0_180] : memref<4x36xf32, #tpu.memory_space<vmem>>, vector<4x36xf32>
    %c0_181 = arith.constant 0 : index
    %c0_182 = arith.constant 0 : index
    %215 = vector.load %arg8[%c0_181, %c0_182] : memref<36x512xf32, #tpu.memory_space<vmem>>, vector<36x512xf32>
    %cst_183 = arith.constant dense<0.000000e+00> : vector<4x512xf32>
    %216 = tpu.matmul %214, %215, %cst_183 {dimension_numbers = #tpu.dot_dimension_numbers<[1], [0], [0], [1], [0, 0, 1, 1], [], []>} : vector<4x36xf32>, vector<36x512xf32>, vector<4x512xf32> -> vector<4x512xf32>
    %c0_184 = arith.constant 0 : index
    %c0_185 = arith.constant 0 : index
    %217 = vector.load %arg5[%c0_184, %c0_185] : memref<4x1xf32, #tpu.memory_space<vmem>>, vector<4x1xf32>
    %218 = vector.broadcast %217 : vector<4x1xf32> to vector<4x512xf32>
    %219 = arith.addf %216, %218 : vector<4x512xf32>
    %220 = vector.extract_strided_slice %219 {offsets = [0, 0], sizes = [4, 256], strides = [1, 1]} : vector<4x512xf32> to vector<4x256xf32>
    %221 = vector.extract_strided_slice %0 {offsets = [0, 0, 0], sizes = [1, 4, 256], strides = [1, 1, 1]} : vector<2x4x256xf32> to vector<1x4x256xf32>
    %222 = vector.shape_cast %221 : vector<1x4x256xf32> to vector<4x256xf32>
    %223 = arith.addf %220, %222 : vector<4x256xf32>
    %c0_186 = arith.constant 0 : index
    %c0_187 = arith.constant 0 : index
    %c0_188 = arith.constant 0 : index
    %224 = vector.load %arg6[%c0_186, %c0_187, %c0_188] : memref<2x4x256xf32, #tpu.memory_space<vmem>>, vector<1x4x256xf32>
    %225 = vector.shape_cast %224 : vector<1x4x256xf32> to vector<4x256xf32>
    %226 = vector.shape_cast %223 : vector<4x256xf32> to vector<1x4x256xf32>
    tpu.vector_store %arg6[%c0_186, %c0_187, %c0_188], %226 {strides = array<i32>} : memref<2x4x256xf32, #tpu.memory_space<vmem>>, vector<1x4x256xf32>,
    %227 = vector.extract_strided_slice %219 {offsets = [0, 256], sizes = [4, 256], strides = [1, 1]} : vector<4x512xf32> to vector<4x256xf32>
    %228 = vector.extract_strided_slice %0 {offsets = [1, 0, 0], sizes = [1, 4, 256], strides = [1, 1, 1]} : vector<2x4x256xf32> to vector<1x4x256xf32>
    %229 = vector.shape_cast %228 : vector<1x4x256xf32> to vector<4x256xf32>
    %230 = arith.addf %227, %229 : vector<4x256xf32>
    %c1_189 = arith.constant 1 : index
    %c0_190 = arith.constant 0 : index
    %c0_191 = arith.constant 0 : index
    %231 = vector.load %arg6[%c1_189, %c0_190, %c0_191] : memref<2x4x256xf32, #tpu.memory_space<vmem>>, vector<1x4x256xf32>
    %232 = vector.shape_cast %231 : vector<1x4x256xf32> to vector<4x256xf32>
    %233 = vector.shape_cast %230 : vector<4x256xf32> to vector<1x4x256xf32>
    tpu.vector_store %arg6[%c1_189, %c0_190, %c0_191], %233 {strides = array<i32>} : memref<2x4x256xf32, #tpu.memory_space<vmem>>, vector<1x4x256xf32>,
    return
  }
  func.func @transform_0(%arg0: i32) -> (i32, i32, i32) {
    %c0_i32 = arith.constant 0 : i32
    %c0_i32_0 = arith.constant 0 : i32
    %c0_i32_1 = arith.constant 0 : i32
    return %arg0, %c0_i32, %c0_i32_0 : i32, i32, i32
  }
  func.func @transform_1(%arg0: i32) -> (i32, i32) {
    %c0_i32 = arith.constant 0 : i32
    %c0_i32_0 = arith.constant 0 : i32
    %c0_i32_1 = arith.constant 0 : i32
    return %c0_i32, %c0_i32_0 : i32, i32
  }
  func.func @transform_2(%arg0: i32) -> (i32, i32) {
    %c0_i32 = arith.constant 0 : i32
    %c0_i32_0 = arith.constant 0 : i32
    %c0_i32_1 = arith.constant 0 : i32
    return %c0_i32, %c0_i32_0 : i32, i32
  }
  func.func @transform_3(%arg0: i32) -> (i32, i32) {
    %c0_i32 = arith.constant 0 : i32
    %c0_i32_0 = arith.constant 0 : i32
    %c0_i32_1 = arith.constant 0 : i32
    return %c0_i32, %c0_i32_0 : i32, i32
  }
  func.func @transform_4(%arg0: i32) -> (i32, i32) {
    %c0_i32 = arith.constant 0 : i32
    %c0_i32_0 = arith.constant 0 : i32
    %c0_i32_1 = arith.constant 0 : i32
    return %c0_i32, %c0_i32_0 : i32, i32
  }
  func.func @transform_5(%arg0: i32) -> (i32, i32, i32) {
    %c0_i32 = arith.constant 0 : i32
    %c0_i32_0 = arith.constant 0 : i32
    %c0_i32_1 = arith.constant 0 : i32
    return %arg0, %c0_i32, %c0_i32_0 : i32, i32, i32
  }
}

</mosaic_0001>

<llo_original>
// kernel: tpu_custom_call.1
$region0: #{tpu_custom_call.1}
  #allocation0 [shape = 'u32[]', space=smem, size = 0x4, offset = 0x4, fixed_abs, tag = 'smem constant byte address 0x4 - core index']
  #allocation1 [shape = 'u32[144,128]{1,0:T(1,128)}', space=vmem, size = 0x12000, scoped, tag = 'internal scratch']
  #allocation2 [shape = 'f32[4,290]{1,0:T(4,128)}', space=vmem, size = 0x1800, scoped, tag = 'scratch operand']
  #allocation3 [shape = 'f32[36,512]{1,0:T(8,128)}', space=vmem, size = 0x14000, scoped, tag = 'scratch operand']
  %s0 = inlined_call_operand.hbm [shape: f32[2,4,256], index: 0, kind: input, shape index: {}]
  %s1 = inlined_call_operand.vmem [shape: f32[4,36], index: 1, kind: input, shape index: {}]
  %s2 = inlined_call_operand.vmem [shape: f32[4,1], index: 2, kind: input, shape index: {}]
  %s3 = inlined_call_operand.vmem [shape: f32[4,36], index: 3, kind: input, shape index: {}]
  %s4 = inlined_call_operand.vmem [shape: f32[4,1], index: 4, kind: input, shape index: {}]
  %s5 = inlined_call_operand.hbm [shape: f32[2,4,256], index: 5, kind: output, shape index: {}]
  %s6 = sld [smem:[#allocation0]]
  $region34: #{tpu_custom_call.1} parent=0
    _
  %s8 = ssub.s32 1, %s6
  %s9 = scalar_select 0, %s8, %s6
  $region1: #{tpu_custom_call.1} parent=0
    #allocation4 [shape = 'u8[8192]{0}', space=vmem, size = 0x2000, scoped, tag = 'input window, operand 0, single buffered']
    #allocation5 [shape = 's32[1]{0}', space=sflag, size = 0x4, scoped, tag = 'scoped memory for tpu_custom_call.1']
    #allocation6 [shape = 's32[1]{0}', space=sflag, size = 0x4, scoped, tag = 'scoped memory for tpu_custom_call.1']
    #allocation7 [shape = 'u8[8192]{0}', space=vmem, size = 0x2000, scoped, tag = 'output window, operand 0, single buffered']
    %10 = vsyncpa [#allocation5], 0
    %11 = vsyncpa [#allocation6], 0
    // Predicated region
    $region2: #{tpu_custom_call.1} parent=1 // pred_check
      _
    $region3: #{tpu_custom_call.1} parent=1 // pred_check_branch
      %13 = sbr.rel (0) target = $region5
    $region4: #{tpu_custom_call.1} parent=1 // pred_region
      %s15 = ssub.s32 256, 256
      %16 = vsyncadd [#allocation5], %s15
      %s17 = sshll.u32 [#allocation4], 4
      %s18 = int_to_ptr.vmem [resolvable:$true] %s17
      %23 = dma.hbm_to_vmem [thread:$0]  %s0, 256, %s18, [#allocation5], 128, 128, 8
    $region5: #{tpu_custom_call.1} parent=1 // pred_fallthru
      _
    // Predicated region
    $region6: #{tpu_custom_call.1} parent=1 // pred_check
      _
    $region7: #{tpu_custom_call.1} parent=1 // pred_check_branch
      %25 = sbr.rel (0) target = $region9
    $region8: #{tpu_custom_call.1} parent=1 // pred_region
      _
    $region9: #{tpu_custom_call.1} parent=1 // pred_fallthru
      _
    // Predicated region
    $region10: #{tpu_custom_call.1} parent=1 // pred_check
      _
    $region11: #{tpu_custom_call.1} parent=1 // pred_check_branch
      %27 = sbr.rel (0) target = $region13
    $region12: #{tpu_custom_call.1} parent=1 // pred_region
      _
    $region13: #{tpu_custom_call.1} parent=1 // pred_fallthru
      _
    // Predicated region
    $region14: #{tpu_custom_call.1} parent=1 // pred_check
      _
    $region15: #{tpu_custom_call.1} parent=1 // pred_check_branch
      %29 = sbr.rel (0) target = $region17
    $region16: #{tpu_custom_call.1} parent=1 // pred_region
      _
    $region17: #{tpu_custom_call.1} parent=1 // pred_fallthru
      _
    // Predicated region
    $region18: #{tpu_custom_call.1} parent=1 // pred_check
      _
    $region19: #{tpu_custom_call.1} parent=1 // pred_check_branch
      %31 = sbr.rel (0) target = $region21
    $region20: #{tpu_custom_call.1} parent=1 // pred_region
      _
    $region21: #{tpu_custom_call.1} parent=1 // pred_fallthru
      _
    // Predicated region
    $region22: #{tpu_custom_call.1} parent=1 // pred_check
      _
    $region23: #{tpu_custom_call.1} parent=1 // pred_check_branch
      %33 = sbr.rel (0) target = $region25
    $region24: #{tpu_custom_call.1} parent=1 // pred_region
      %34 = dma.done [#allocation5], 256
    $region25: #{tpu_custom_call.1} parent=1 // pred_fallthru
      _
    %v35 = vld [vmem:[#allocation4] sm:$0xff]
    %v36 = vld [vmem:[#allocation4 + $0x8] sm:$0xff]
    %v37 = vlaneseq
    %v38 = vand.u32 %v37, 127
    %v39 = vadd.s32 %v38, 128
    %vm40 = vcmp.lt.s32.totalorder %v38, 0
    %v41 = vsub.s32 0, %v38
    %v42 = vsel %vm40, %v41, %v38
    %v43 = vshrl.u32 %v42, 4
    %v44 = vand.u32 %v42, 15
    %v45 = vsub.s32 0, %v44
    %v46 = vsel %vm40, %v45, %v44
    %vm47 = vcmp.lt.s32.totalorder %v39, 0
    %v48 = vsub.s32 0, %v39
    %v49 = vsel %vm47, %v48, %v39
    %v50 = vshrl.u32 %v49, 4
    %v51 = vand.u32 %v49, 15
    %v52 = vsub.s32 0, %v51
    %v53 = vsel %vm47, %v52, %v51
    %vm54 = vcmp.ne.s32.totalorder %v46, 0
    %vm55 = vcmp.ne.s32.totalorder %v53, 0
    %vm56 = vcmp.lt.s32.totalorder %v46, 0
    %vm57 = vcmp.lt.s32.totalorder %v53, 0
    %vm58 = vmand %vm56, %vm54
    %vm59 = vmand %vm57, %vm55
    %v60 = vadd.s32 %v46, 16
    %v61 = vadd.s32 %v53, 16
    %v62 = vsel %vm58, %v60, %v46
    %v63 = vsel %vm59, %v61, %v53
    %vm64 = vcmp.ge.s32.totalorder %v62, 1
    %vm65 = vcmp.ge.s32.totalorder %v63, 1
    %vm66 = vcmp.le.s32.totalorder %v62, 14
    %vm67 = vcmp.le.s32.totalorder %v63, 14
    %vm68 = vcmask 134144
    %69 = vst.msk [vmem:[#allocation2] sm:$0xf] %vm68, 0.0
    %vm70 = vcmask 273544
    %71 = vst.msk [vmem:[#allocation2 + $0x8] sm:$0xf] %vm70, 0.0
    %73 = vrot.lane.b32.xlu0 %v35, 17
    %v74 = vpop.permute.xlu0 %73
    %v75 = vrot.slane %v74, 4
    %vm76 = vcmask 138240
    %v77 = vsel %vm76, %v75, %v74
    %vm80 = vcmask 1043592
    %vm81 = vcmask 1047556
    %vm82 = vmor %vm81, %vm80
    %83 = vst.msk [vmem:[#allocation2] sm:$0xff] %vm82, %v77
    %84 = vst.msk [vmem:[#allocation2 + $0x8] sm:$0xf] %vm68, %v75
    %v85 = vld [vmem:[#allocation2] sm:$0xff]
    %v86 = vsel %vm64, 1, 0
    %v87 = vsel %vm65, 1, 0
    %vm88 = vcmp.eq.s32.totalorder %v86, 1
    %vm89 = vcmp.eq.s32.totalorder %v87, 1
    %v91 = vcombine.high %v85, %v85
    %v93 = vsel %vm88, %v85, 0.0
    %v94 = vsel %vm89, %v91, 0.0
    %95 = vst [vmem:[#allocation3] sm:$0xf] %v93
    %96 = vst [vmem:[#allocation3 + $0x8] sm:$0xf] %v94
    %v97 = vld [vmem:[#allocation2] sm:$0xff]
    %v98 = vld [vmem:[#allocation2 + $0x8] sm:$0xf]
    %v101 = vcombine.low %v97, %v97
    %v102 = vcombine.low %v98, %v98
    %103 = vrot.lane.b32.xlu0 %v101, 127
    %v104 = vpop.permute.xlu0 %103
    %105 = vrot.lane.b32.xlu0 %v97, 127
    %v106 = vpop.permute.xlu0 %105
    %107 = vrot.lane.b32.xlu0 %v102, 127
    %v108 = vpop.permute.xlu0 %107
    %vm109 = vcmask 1039360
    %v110 = vsel %vm109, %v104, %v106
    %v111 = vsel %vm109, %v106, %v108
    %114 = vst [vmem:[#allocation3] sm:$0xf0] %v110
    %115 = vst [vmem:[#allocation3 + $0x8] sm:$0xf0] %v111
    %v116 = vld [vmem:[#allocation2] sm:$0xff]
    %v117 = vld [vmem:[#allocation2 + $0x8] sm:$0xf]
    %v118 = vsel %vm66, 1, 0
    %v119 = vsel %vm67, 1, 0
    %vm120 = vcmp.eq.s32.totalorder %v118, 1
    %vm121 = vcmp.eq.s32.totalorder %v119, 1
    %v124 = vcombine.high %v116, %v116
    %125 = vrot.lane.b32.xlu0 %v116, 126
    %v126 = vpop.permute.xlu0 %125
    %127 = vrot.lane.b32.xlu0 %v124, 126
    %v128 = vpop.permute.xlu0 %127
    %129 = vrot.lane.b32.xlu0 %v117, 126
    %v130 = vpop.permute.xlu0 %129
    %vm131 = vcmask 1031168
    %v132 = vsel %vm131, %v126, %v128
    %v133 = vsel %vm131, %v128, %v130
    %v136 = vsel %vm120, %v132, 0.0
    %v137 = vsel %vm121, %v133, 0.0
    %138 = vst [vmem:[#allocation3 + $0x20] sm:$0xf] %v136
    %139 = vst [vmem:[#allocation3 + $0x28] sm:$0xf] %v137
    %v140 = vld [vmem:[#allocation2] sm:$0xff]
    %v141 = vld [vmem:[#allocation2 + $0x8] sm:$0xf]
    %v144 = vcombine.high %v140, %v140
    %145 = vrot.lane.b32.xlu0 %v140, 112
    %v146 = vpop.permute.xlu0 %145
    %147 = vrot.lane.b32.xlu0 %v144, 112
    %v148 = vpop.permute.xlu0 %147
    %149 = vrot.lane.b32.xlu0 %v141, 112
    %v150 = vpop.permute.xlu0 %149
    %vm151 = vcmask 916480
    %v152 = vsel %vm151, %v146, %v148
    %v153 = vsel %vm151, %v148, %v150
    %v156 = vsel %vm88, %v152, 0.0
    %v157 = vsel %vm89, %v153, 0.0
    %v160 = vrot.slane %v156, 4
    %v161 = vrot.slane %v157, 4
    %164 = vst [vmem:[#allocation3 + $0x20] sm:$0xf0] %v160
    %165 = vst [vmem:[#allocation3 + $0x28] sm:$0xf0] %v161
    %v166 = vld [vmem:[#allocation2] sm:$0xff]
    %v167 = vld [vmem:[#allocation2 + $0x8] sm:$0xf]
    %v170 = vcombine.high %v166, %v166
    %171 = vrot.lane.b32.xlu0 %v166, 111
    %v172 = vpop.permute.xlu0 %171
    %173 = vrot.lane.b32.xlu0 %v170, 111
    %v174 = vpop.permute.xlu0 %173
    %175 = vrot.lane.b32.xlu0 %v167, 111
    %v176 = vpop.permute.xlu0 %175
    %vm177 = vcmask 908288
    %v178 = vsel %vm177, %v172, %v174
    %v179 = vsel %vm177, %v174, %v176
    %182 = vst [vmem:[#allocation3 + $0x40] sm:$0xf] %v178
    %183 = vst [vmem:[#allocation3 + $0x48] sm:$0xf] %v179
    %v184 = vld [vmem:[#allocation2] sm:$0xff]
    %v185 = vld [vmem:[#allocation2 + $0x8] sm:$0xf]
    %v188 = vcombine.high %v184, %v184
    %189 = vrot.lane.b32.xlu0 %v184, 110
    %v190 = vpop.permute.xlu0 %189
    %191 = vrot.lane.b32.xlu0 %v188, 110
    %v192 = vpop.permute.xlu0 %191
    %193 = vrot.lane.b32.xlu0 %v185, 110
    %v194 = vpop.permute.xlu0 %193
    %vm195 = vcmask 900096
    %v196 = vsel %vm195, %v190, %v192
    %v197 = vsel %vm195, %v192, %v194
    %v200 = vsel %vm120, %v196, 0.0
    %v201 = vsel %vm121, %v197, 0.0
    %v204 = vrot.slane %v200, 4
    %v205 = vrot.slane %v201, 4
    %208 = vst [vmem:[#allocation3 + $0x40] sm:$0xf0] %v204
    %209 = vst [vmem:[#allocation3 + $0x48] sm:$0xf0] %v205
    %v210 = vld [vmem:[#allocation2] sm:$0xff]
    %v211 = vld [vmem:[#allocation2 + $0x8] sm:$0xf]
    %v214 = vcombine.high %v210, %v210
    %215 = vrot.lane.b32.xlu0 %v210, 96
    %v216 = vpop.permute.xlu0 %215
    %217 = vrot.lane.b32.xlu0 %v214, 96
    %v218 = vpop.permute.xlu0 %217
    %219 = vrot.lane.b32.xlu0 %v211, 96
    %v220 = vpop.permute.xlu0 %219
    %vm221 = vcmask 785408
    %v222 = vsel %vm221, %v216, %v218
    %v223 = vsel %vm221, %v218, %v220
    %v226 = vsel %vm88, %v222, 0.0
    %v227 = vsel %vm89, %v223, 0.0
    %228 = vst [vmem:[#allocation3 + $0x60] sm:$0xf] %v226
    %229 = vst [vmem:[#allocation3 + $0x68] sm:$0xf] %v227
    %v230 = vld [vmem:[#allocation2] sm:$0xff]
    %v231 = vld [vmem:[#allocation2 + $0x8] sm:$0xf]
    %v234 = vcombine.low %v230, %v230
    %v235 = vcombine.low %v231, %v231
    %236 = vrot.lane.b32.xlu0 %v234, 95
    %v237 = vpop.permute.xlu0 %236
    %238 = vrot.lane.b32.xlu0 %v230, 95
    %v239 = vpop.permute.xlu0 %238
    %240 = vrot.lane.b32.xlu0 %v235, 95
    %v241 = vpop.permute.xlu0 %240
    %vm242 = vcmask 777216
    %v243 = vsel %vm242, %v237, %v239
    %v244 = vsel %vm242, %v239, %v241
    %247 = vst [vmem:[#allocation3 + $0x60] sm:$0xf0] %v243
    %248 = vst [vmem:[#allocation3 + $0x68] sm:$0xf0] %v244
    %v249 = vld [vmem:[#allocation2] sm:$0xff]
    %v250 = vld [vmem:[#allocation2 + $0x8] sm:$0xf]
    %v253 = vcombine.high %v249, %v249
    %254 = vrot.lane.b32.xlu0 %v249, 94
    %v255 = vpop.permute.xlu0 %254
    %256 = vrot.lane.b32.xlu0 %v253, 94
    %v257 = vpop.permute.xlu0 %256
    %258 = vrot.lane.b32.xlu0 %v250, 94
    %v259 = vpop.permute.xlu0 %258
    %vm260 = vcmask 769024
    %v261 = vsel %vm260, %v255, %v257
    %v262 = vsel %vm260, %v257, %v259
    %v265 = vsel %vm120, %v261, 0.0
    %v266 = vsel %vm121, %v262, 0.0
    %267 = vst [vmem:[#allocation3 + $0x80] sm:$0xf] %v265
    %268 = vst [vmem:[#allocation3 + $0x88] sm:$0xf] %v266
    %270 = vrot.lane.b32.xlu0 %v36, 17
    %v271 = vpop.permute.xlu0 %270
    %v272 = vrot.slane %v271, 4
    %v273 = vsel %vm76, %v272, %v271
    %276 = vst.msk [vmem:[#allocation2] sm:$0xff] %vm82, %v273
    %277 = vst.msk [vmem:[#allocation2 + $0x8] sm:$0xf] %vm68, %v272
    %v278 = vld [vmem:[#allocation2] sm:$0xff]
    %v280 = vcombine.high %v278, %v278
    %v282 = vsel %vm88, %v278, 0.0
    %v283 = vsel %vm89, %v280, 0.0
    %284 = vst [vmem:[#allocation3 + $0x10] sm:$0xf] %v282
    %285 = vst [vmem:[#allocation3 + $0x18] sm:$0xf] %v283
    %v286 = vld [vmem:[#allocation2] sm:$0xff]
    %v287 = vld [vmem:[#allocation2 + $0x8] sm:$0xf]
    %v290 = vcombine.low %v286, %v286
    %v291 = vcombine.low %v287, %v287
    %292 = vrot.lane.b32.xlu0 %v290, 127
    %v293 = vpop.permute.xlu0 %292
    %294 = vrot.lane.b32.xlu0 %v286, 127
    %v295 = vpop.permute.xlu0 %294
    %296 = vrot.lane.b32.xlu0 %v291, 127
    %v297 = vpop.permute.xlu0 %296
    %v298 = vsel %vm109, %v293, %v295
    %v299 = vsel %vm109, %v295, %v297
    %302 = vst [vmem:[#allocation3 + $0x10] sm:$0xf0] %v298
    %303 = vst [vmem:[#allocation3 + $0x18] sm:$0xf0] %v299
    %v304 = vld [vmem:[#allocation2] sm:$0xff]
    %v305 = vld [vmem:[#allocation2 + $0x8] sm:$0xf]
    %v308 = vcombine.high %v304, %v304
    %309 = vrot.lane.b32.xlu0 %v304, 126
    %v310 = vpop.permute.xlu0 %309
    %311 = vrot.lane.b32.xlu0 %v308, 126
    %v312 = vpop.permute.xlu0 %311
    %313 = vrot.lane.b32.xlu0 %v305, 126
    %v314 = vpop.permute.xlu0 %313
    %v315 = vsel %vm131, %v310, %v312
    %v316 = vsel %vm131, %v312, %v314
    %v319 = vsel %vm120, %v315, 0.0
    %v320 = vsel %vm121, %v316, 0.0
    %321 = vst [vmem:[#allocation3 + $0x30] sm:$0xf] %v319
    %322 = vst [vmem:[#allocation3 + $0x38] sm:$0xf] %v320
    %v323 = vld [vmem:[#allocation2] sm:$0xff]
    %v324 = vld [vmem:[#allocation2 + $0x8] sm:$0xf]
    %v327 = vcombine.high %v323, %v323
    %328 = vrot.lane.b32.xlu0 %v323, 112
    %v329 = vpop.permute.xlu0 %328
    %330 = vrot.lane.b32.xlu0 %v327, 112
    %v331 = vpop.permute.xlu0 %330
    %332 = vrot.lane.b32.xlu0 %v324, 112
    %v333 = vpop.permute.xlu0 %332
    %v334 = vsel %vm151, %v329, %v331
    %v335 = vsel %vm151, %v331, %v333
    %v338 = vsel %vm88, %v334, 0.0
    %v339 = vsel %vm89, %v335, 0.0
    %v342 = vrot.slane %v338, 4
    %v343 = vrot.slane %v339, 4
    %346 = vst [vmem:[#allocation3 + $0x30] sm:$0xf0] %v342
    %347 = vst [vmem:[#allocation3 + $0x38] sm:$0xf0] %v343
    %v348 = vld [vmem:[#allocation2] sm:$0xff]
    %v349 = vld [vmem:[#allocation2 + $0x8] sm:$0xf]
    %v352 = vcombine.high %v348, %v348
    %353 = vrot.lane.b32.xlu0 %v348, 111
    %v354 = vpop.permute.xlu0 %353
    %355 = vrot.lane.b32.xlu0 %v352, 111
    %v356 = vpop.permute.xlu0 %355
    %357 = vrot.lane.b32.xlu0 %v349, 111
    %v358 = vpop.permute.xlu0 %357
    %v359 = vsel %vm177, %v354, %v356
    %v360 = vsel %vm177, %v356, %v358
    %363 = vst [vmem:[#allocation3 + $0x50] sm:$0xf] %v359
    %364 = vst [vmem:[#allocation3 + $0x58] sm:$0xf] %v360
    %v365 = vld [vmem:[#allocation2] sm:$0xff]
    %v366 = vld [vmem:[#allocation2 + $0x8] sm:$0xf]
    %v369 = vcombine.high %v365, %v365
    %370 = vrot.lane.b32.xlu0 %v365, 110
    %v371 = vpop.permute.xlu0 %370
    %372 = vrot.lane.b32.xlu0 %v369, 110
    %v373 = vpop.permute.xlu0 %372
    %374 = vrot.lane.b32.xlu0 %v366, 110
    %v375 = vpop.permute.xlu0 %374
    %v376 = vsel %vm195, %v371, %v373
    %v377 = vsel %vm195, %v373, %v375
    %v380 = vsel %vm120, %v376, 0.0
    %v381 = vsel %vm121, %v377, 0.0
    %v384 = vrot.slane %v380, 4
    %v385 = vrot.slane %v381, 4
    %388 = vst [vmem:[#allocation3 + $0x50] sm:$0xf0] %v384
    %389 = vst [vmem:[#allocation3 + $0x58] sm:$0xf0] %v385
    %v390 = vld [vmem:[#allocation2] sm:$0xff]
    %v391 = vld [vmem:[#allocation2 + $0x8] sm:$0xf]
    %v394 = vcombine.high %v390, %v390
    %395 = vrot.lane.b32.xlu0 %v390, 96
    %v396 = vpop.permute.xlu0 %395
    %397 = vrot.lane.b32.xlu0 %v394, 96
    %v398 = vpop.permute.xlu0 %397
    %399 = vrot.lane.b32.xlu0 %v391, 96
    %v400 = vpop.permute.xlu0 %399
    %v401 = vsel %vm221, %v396, %v398
    %v402 = vsel %vm221, %v398, %v400
    %v405 = vsel %vm88, %v401, 0.0
    %v406 = vsel %vm89, %v402, 0.0
    %407 = vst [vmem:[#allocation3 + $0x70] sm:$0xf] %v405
    %408 = vst [vmem:[#allocation3 + $0x78] sm:$0xf] %v406
    %v409 = vld [vmem:[#allocation2] sm:$0xff]
    %v410 = vld [vmem:[#allocation2 + $0x8] sm:$0xf]
    %v413 = vcombine.low %v409, %v409
    %v414 = vcombine.low %v410, %v410
    %415 = vrot.lane.b32.xlu0 %v413, 95
    %v416 = vpop.permute.xlu0 %415
    %417 = vrot.lane.b32.xlu0 %v409, 95
    %v418 = vpop.permute.xlu0 %417
    %419 = vrot.lane.b32.xlu0 %v414, 95
    %v420 = vpop.permute.xlu0 %419
    %v421 = vsel %vm242, %v416, %v418
    %v422 = vsel %vm242, %v418, %v420
    %425 = vst [vmem:[#allocation3 + $0x70] sm:$0xf0] %v421
    %426 = vst [vmem:[#allocation3 + $0x78] sm:$0xf0] %v422
    %v427 = vld [vmem:[#allocation2] sm:$0xff]
    %v428 = vld [vmem:[#allocation2 + $0x8] sm:$0xf]
    %v431 = vcombine.high %v427, %v427
    %432 = vrot.lane.b32.xlu0 %v427, 94
    %v433 = vpop.permute.xlu0 %432
    %434 = vrot.lane.b32.xlu0 %v431, 94
    %v435 = vpop.permute.xlu0 %434
    %436 = vrot.lane.b32.xlu0 %v428, 94
    %v437 = vpop.permute.xlu0 %436
    %v438 = vsel %vm260, %v433, %v435
    %v439 = vsel %vm260, %v435, %v437
    %v442 = vsel %vm120, %v438, 0.0
    %v443 = vsel %vm121, %v439, 0.0
    %444 = vst [vmem:[#allocation3 + $0x90] sm:$0xf] %v442
    %445 = vst [vmem:[#allocation3 + $0x98] sm:$0xf] %v443
    %v446 = vld [vmem:[%s1] sm:$0xf]
    %v447 = vld [vmem:[#allocation3] sm:$0xff]
    %v448 = vld [vmem:[#allocation3 + $0x8] sm:$0xff]
    %v449 = vld [vmem:[#allocation3 + $0x10] sm:$0xff]
    %v450 = vld [vmem:[#allocation3 + $0x18] sm:$0xff]
    %v451 = vld [vmem:[#allocation3 + $0x20] sm:$0xff]
    %v452 = vld [vmem:[#allocation3 + $0x28] sm:$0xff]
    %v453 = vld [vmem:[#allocation3 + $0x30] sm:$0xff]
    %v454 = vld [vmem:[#allocation3 + $0x38] sm:$0xff]
    %v455 = vld [vmem:[#allocation3 + $0x40] sm:$0xff]
    %v456 = vld [vmem:[#allocation3 + $0x48] sm:$0xff]
    %v457 = vld [vmem:[#allocation3 + $0x50] sm:$0xff]
    %v458 = vld [vmem:[#allocation3 + $0x58] sm:$0xff]
    %v459 = vld [vmem:[#allocation3 + $0x60] sm:$0xff]
    %v460 = vld [vmem:[#allocation3 + $0x68] sm:$0xff]
    %v461 = vld [vmem:[#allocation3 + $0x70] sm:$0xff]
    %v462 = vld [vmem:[#allocation3 + $0x78] sm:$0xff]
    %v463 = vld [vmem:[#allocation3 + $0x80] sm:$0xf]
    %v464 = vld [vmem:[#allocation3 + $0x88] sm:$0xf]
    %v465 = vld [vmem:[#allocation3 + $0x90] sm:$0xf]
    %v466 = vld [vmem:[#allocation3 + $0x98] sm:$0xf]
    %v467 = vld [vmem:[%s2] sm:$0xf]
    %469 = vset.pattern.permute.xlu0 0
    %470 = vperm.xlu0 %469, %v467
    %v471 = vpop.permute.xlu0 %470
    %vm473 = vcmask 293888
    %v475 = vsel %vm473, %v446, 0
    %vm477 = vcmask 1043456
    %v479 = vsel %vm477, %v463, 0
    %v482 = vsel %vm477, %v464, 0
    %v485 = vsel %vm477, %v465, 0
    %v488 = vsel %vm477, %v466, 0
    %490 = vmatprep.subr.mxu0 %v448
    %491 = vmatpush1.msra.mxu0 %v447
    %492 = vmatprep.subr.mxu0 %v452
    %493 = vmatpush1.msra.mxu0 %v451
    %494 = vmatprep.subr.mxu0 %v456
    %495 = vmatpush1.msra.mxu0 %v455
    %496 = vmatprep.subr.mxu0 %v460
    %497 = vmatpush1.msra.mxu0 %v459
    %498 = vmatprep.subr.mxu0 %v482
    %499 = vmatpush1.msra.mxu0 %v479
    %500 = vmatprep.subr.mxu0 0.0
    %501 = vmatpush1.msra.mxu0 0.0
    %502 = vmatprep.subr.mxu0 0.0
    %503 = vmatpush1.msra.mxu0 0.0
    %504 = vmatprep.subr.mxu0 0.0
    %505 = vmatpush1.msra.mxu0 0.0
    %506 = vmatprep.subr.mxu0 0.0
    %507 = vmatpush1.msra.mxu0 0.0
    %508 = vmatprep.subr.mxu0 0.0
    %509 = vmatpush1.msra.mxu0 0.0
    %510 = vmatprep.subr.mxu0 0.0
    %511 = vmatpush1.msra.mxu0 0.0
    %512 = vmatprep.subr.mxu0 0.0
    %513 = vmatpush1.msra.mxu0 0.0
    %514 = vmatprep.subr.mxu0 0.0
    %515 = vmatpush1.msra.mxu0 0.0
    %516 = vmatprep.subr.mxu0 0.0
    %517 = vmatpush1.msra.mxu0 0.0
    %518 = vmatprep.subr.mxu0 0.0
    %519 = vmatpush1.msra.mxu0 0.0
    %520 = vmatprep.subr.mxu0 0.0
    %521 = vmatpush1.msra.mxu0 0.0
    %522 = vmatprep.subr.mxu0 0.0
    %523 = vmatpush1.msra.mxu0 0.0
    %524 = vmatprep.subr.mxu0 0.0
    %525 = vmatpush1.msra.mxu0 0.0
    %526 = vmatprep.subr.mxu0 0.0
    %527 = vmatpush1.msra.mxu0 0.0
    %528 = vmatprep.subr.mxu0 0.0
    %529 = vmatpush1.msra.mxu0 0.0
    %530 = vmatprep.subr.mxu0 0.0
    %531 = vmatpush1.msra.mxu0 0.0
    %532 = vmatprep.subr.mxu0 0.0
    %533 = vmatpush1.msra.mxu0 0.0
    %534 = vmatprep.subr.mxu0 0.0
    %535 = vmatpush1.msra.mxu0 0.0
    %536 = vmatprep.subr.mxu0 0.0
    %537 = vmatpush1.msra.mxu0 0.0
    %538 = vmatprep.subr.mxu0 0.0
    %539 = vmatpush1.msra.mxu0 0.0
    %540 = vmatprep.subr.mxu0 0.0
    %541 = vmatpush1.msra.mxu0 0.0
    %542 = vmatprep.subr.mxu0 0.0
    %543 = vmatpush1.msra.mxu0 0.0
    %544 = vmatprep.subr.mxu0 0.0
    %545 = vmatpush1.msra.mxu0 0.0
    %546 = vmatprep.subr.mxu0 0.0
    %547 = vmatpush1.msra.mxu0 0.0
    %548 = vmatprep.subr.mxu0 0.0
    %549 = vmatpush1.msra.mxu0 0.0
    %550 = vmatprep.subr.mxu0 0.0
    %551 = vmatpush1.msra.mxu0 0.0
    %552 = vmatprep.subr.mxu0 0.0
    %553 = vmatpush1.msra.mxu0 0.0
    %554 = vmatprep.mubr.f32.mxu0 0.0
    %555 = vmatmul.mubr.f32.gmra.mrb[0].mxu0 %v475
    %v556 = vpop.f32.mrb[0].mxu0
    %v557 = vadd.f32 %v471, %v556
    %v558 = vpop.f32.mrb[0].mxu0
    %v559 = vadd.f32 %v471, %v558
    %560 = vdwg.mxu0
    %561 = vmatprep.subr.mxu0 %v450
    %562 = vmatpush1.msra.mxu0 %v449
    %563 = vmatprep.subr.mxu0 %v454
    %564 = vmatpush1.msra.mxu0 %v453
    %565 = vmatprep.subr.mxu0 %v458
    %566 = vmatpush1.msra.mxu0 %v457
    %567 = vmatprep.subr.mxu0 %v462
    %568 = vmatpush1.msra.mxu0 %v461
    %569 = vmatprep.subr.mxu0 %v488
    %570 = vmatpush1.msra.mxu0 %v485
    %571 = vmatprep.subr.mxu0 0.0
    %572 = vmatpush1.msra.mxu0 0.0
    %573 = vmatprep.subr.mxu0 0.0
    %574 = vmatpush1.msra.mxu0 0.0
    %575 = vmatprep.subr.mxu0 0.0
    %576 = vmatpush1.msra.mxu0 0.0
    %577 = vmatprep.subr.mxu0 0.0
    %578 = vmatpush1.msra.mxu0 0.0
    %579 = vmatprep.subr.mxu0 0.0
    %580 = vmatpush1.msra.mxu0 0.0
    %581 = vmatprep.subr.mxu0 0.0
    %582 = vmatpush1.msra.mxu0 0.0
    %583 = vmatprep.subr.mxu0 0.0
    %584 = vmatpush1.msra.mxu0 0.0
    %585 = vmatprep.subr.mxu0 0.0
    %586 = vmatpush1.msra.mxu0 0.0
    %587 = vmatprep.subr.mxu0 0.0
    %588 = vmatpush1.msra.mxu0 0.0
    %589 = vmatprep.subr.mxu0 0.0
    %590 = vmatpush1.msra.mxu0 0.0
    %591 = vmatprep.subr.mxu0 0.0
    %592 = vmatpush1.msra.mxu0 0.0
    %593 = vmatprep.subr.mxu0 0.0
    %594 = vmatpush1.msra.mxu0 0.0
    %595 = vmatprep.subr.mxu0 0.0
    %596 = vmatpush1.msra.mxu0 0.0
    %597 = vmatprep.subr.mxu0 0.0
    %598 = vmatpush1.msra.mxu0 0.0
    %599 = vmatprep.subr.mxu0 0.0
    %600 = vmatpush1.msra.mxu0 0.0
    %601 = vmatprep.subr.mxu0 0.0
    %602 = vmatpush1.msra.mxu0 0.0
    %603 = vmatprep.subr.mxu0 0.0
    %604 = vmatpush1.msra.mxu0 0.0
    %605 = vmatprep.subr.mxu0 0.0
    %606 = vmatpush1.msra.mxu0 0.0
    %607 = vmatprep.subr.mxu0 0.0
    %608 = vmatpush1.msra.mxu0 0.0
    %609 = vmatprep.subr.mxu0 0.0
    %610 = vmatpush1.msra.mxu0 0.0
    %611 = vmatprep.subr.mxu0 0.0
    %612 = vmatpush1.msra.mxu0 0.0
    %613 = vmatprep.subr.mxu0 0.0
    %614 = vmatpush1.msra.mxu0 0.0
    %615 = vmatprep.subr.mxu0 0.0
    %616 = vmatpush1.msra.mxu0 0.0
    %617 = vmatprep.subr.mxu0 0.0
    %618 = vmatpush1.msra.mxu0 0.0
    %619 = vmatprep.subr.mxu0 0.0
    %620 = vmatpush1.msra.mxu0 0.0
    %621 = vmatprep.subr.mxu0 0.0
    %622 = vmatpush1.msra.mxu0 0.0
    %623 = vmatprep.subr.mxu0 0.0
    %624 = vmatpush1.msra.mxu0 0.0
    %625 = vmatprep.mubr.f32.mxu0 0.0
    %626 = vmatmul.mubr.f32.gmra.mrb[0].mxu0 %v475
    %v627 = vpop.f32.mrb[0].mxu0
    %v628 = vadd.f32 %v471, %v627
    %v629 = vpop.f32.mrb[0].mxu0
    %v630 = vadd.f32 %v471, %v629
    %631 = vdwg.mxu0
    %vm632 = vcmp.gt.f32.partialorder %v557, 0.0
    %vm633 = vcmp.gt.f32.partialorder %v559, 0.0
    %vm634 = vcmp.gt.f32.partialorder %v628, 0.0
    %vm635 = vcmp.gt.f32.partialorder %v630, 0.0
    %v636 = vmul.f32 %v557, 0.01
    %v637 = vmul.f32 %v559, 0.01
    %v638 = vmul.f32 %v628, 0.01
    %v639 = vmul.f32 %v630, 0.01
    %v640 = vsel %vm632, %v557, %v636
    %v641 = vsel %vm633, %v559, %v637
    %v642 = vsel %vm634, %v628, %v638
    %v643 = vsel %vm635, %v630, %v639
    %v646 = vcombine.low %v640, %v641
    %647 = vrot.lane.b32.xlu0 %v646, 17
    %v648 = vpop.permute.xlu0 %647
    %v649 = vrot.slane %v648, 4
    %v650 = vsel %vm76, %v649, %v648
    %653 = vst.msk [vmem:[#allocation2] sm:$0xff] %vm82, %v650
    %654 = vst.msk [vmem:[#allocation2 + $0x8] sm:$0xf] %vm68, %v649
    %v655 = vld [vmem:[#allocation2] sm:$0xff]
    %v657 = vcombine.high %v655, %v655
    %v659 = vsel %vm88, %v655, 0.0
    %v660 = vsel %vm89, %v657, 0.0
    %661 = vst [vmem:[#allocation3] sm:$0xf] %v659
    %662 = vst [vmem:[#allocation3 + $0x8] sm:$0xf] %v660
    %v663 = vld [vmem:[#allocation2] sm:$0xff]
    %v664 = vld [vmem:[#allocation2 + $0x8] sm:$0xf]
    %v667 = vcombine.low %v663, %v663
    %v668 = vcombine.low %v664, %v664
    %669 = vrot.lane.b32.xlu0 %v667, 127
    %v670 = vpop.permute.xlu0 %669
    %671 = vrot.lane.b32.xlu0 %v663, 127
    %v672 = vpop.permute.xlu0 %671
    %673 = vrot.lane.b32.xlu0 %v668, 127
    %v674 = vpop.permute.xlu0 %673
    %v675 = vsel %vm109, %v670, %v672
    %v676 = vsel %vm109, %v672, %v674
    %679 = vst [vmem:[#allocation3] sm:$0xf0] %v675
    %680 = vst [vmem:[#allocation3 + $0x8] sm:$0xf0] %v676
    %v681 = vld [vmem:[#allocation2] sm:$0xff]
    %v682 = vld [vmem:[#allocation2 + $0x8] sm:$0xf]
    %v685 = vcombine.high %v681, %v681
    %686 = vrot.lane.b32.xlu0 %v681, 126
    %v687 = vpop.permute.xlu0 %686
    %688 = vrot.lane.b32.xlu0 %v685, 126
    %v689 = vpop.permute.xlu0 %688
    %690 = vrot.lane.b32.xlu0 %v682, 126
    %v691 = vpop.permute.xlu0 %690
    %v692 = vsel %vm131, %v687, %v689
    %v693 = vsel %vm131, %v689, %v691
    %v696 = vsel %vm120, %v692, 0.0
    %v697 = vsel %vm121, %v693, 0.0
    %698 = vst [vmem:[#allocation3 + $0x20] sm:$0xf] %v696
    %699 = vst [vmem:[#allocation3 + $0x28] sm:$0xf] %v697
    %v700 = vld [vmem:[#allocation2] sm:$0xff]
    %v701 = vld [vmem:[#allocation2 + $0x8] sm:$0xf]
    %v704 = vcombine.high %v700, %v700
    %705 = vrot.lane.b32.xlu0 %v700, 112
    %v706 = vpop.permute.xlu0 %705
    %707 = vrot.lane.b32.xlu0 %v704, 112
    %v708 = vpop.permute.xlu0 %707
    %709 = vrot.lane.b32.xlu0 %v701, 112
    %v710 = vpop.permute.xlu0 %709
    %v711 = vsel %vm151, %v706, %v708
    %v712 = vsel %vm151, %v708, %v710
    %v715 = vsel %vm88, %v711, 0.0
    %v716 = vsel %vm89, %v712, 0.0
    %v719 = vrot.slane %v715, 4
    %v720 = vrot.slane %v716, 4
    %723 = vst [vmem:[#allocation3 + $0x20] sm:$0xf0] %v719
    %724 = vst [vmem:[#allocation3 + $0x28] sm:$0xf0] %v720
    %v725 = vld [vmem:[#allocation2] sm:$0xff]
    %v726 = vld [vmem:[#allocation2 + $0x8] sm:$0xf]
    %v729 = vcombine.high %v725, %v725
    %730 = vrot.lane.b32.xlu0 %v725, 111
    %v731 = vpop.permute.xlu0 %730
    %732 = vrot.lane.b32.xlu0 %v729, 111
    %v733 = vpop.permute.xlu0 %732
    %734 = vrot.lane.b32.xlu0 %v726, 111
    %v735 = vpop.permute.xlu0 %734
    %v736 = vsel %vm177, %v731, %v733
    %v737 = vsel %vm177, %v733, %v735
    %740 = vst [vmem:[#allocation3 + $0x40] sm:$0xf] %v736
    %741 = vst [vmem:[#allocation3 + $0x48] sm:$0xf] %v737
    %v742 = vld [vmem:[#allocation2] sm:$0xff]
    %v743 = vld [vmem:[#allocation2 + $0x8] sm:$0xf]
    %v746 = vcombine.high %v742, %v742
    %747 = vrot.lane.b32.xlu0 %v742, 110
    %v748 = vpop.permute.xlu0 %747
    %749 = vrot.lane.b32.xlu0 %v746, 110
    %v750 = vpop.permute.xlu0 %749
    %751 = vrot.lane.b32.xlu0 %v743, 110
    %v752 = vpop.permute.xlu0 %751
    %v753 = vsel %vm195, %v748, %v750
    %v754 = vsel %vm195, %v750, %v752
    %v757 = vsel %vm120, %v753, 0.0
    %v758 = vsel %vm121, %v754, 0.0
    %v761 = vrot.slane %v757, 4
    %v762 = vrot.slane %v758, 4
    %765 = vst [vmem:[#allocation3 + $0x40] sm:$0xf0] %v761
    %766 = vst [vmem:[#allocation3 + $0x48] sm:$0xf0] %v762
    %v767 = vld [vmem:[#allocation2] sm:$0xff]
    %v768 = vld [vmem:[#allocation2 + $0x8] sm:$0xf]
    %v771 = vcombine.high %v767, %v767
    %772 = vrot.lane.b32.xlu0 %v767, 96
    %v773 = vpop.permute.xlu0 %772
    %774 = vrot.lane.b32.xlu0 %v771, 96
    %v775 = vpop.permute.xlu0 %774
    %776 = vrot.lane.b32.xlu0 %v768, 96
    %v777 = vpop.permute.xlu0 %776
    %v778 = vsel %vm221, %v773, %v775
    %v779 = vsel %vm221, %v775, %v777
    %v782 = vsel %vm88, %v778, 0.0
    %v783 = vsel %vm89, %v779, 0.0
    %784 = vst [vmem:[#allocation3 + $0x60] sm:$0xf] %v782
    %785 = vst [vmem:[#allocation3 + $0x68] sm:$0xf] %v783
    %v786 = vld [vmem:[#allocation2] sm:$0xff]
    %v787 = vld [vmem:[#allocation2 + $0x8] sm:$0xf]
    %v790 = vcombine.low %v786, %v786
    %v791 = vcombine.low %v787, %v787
    %792 = vrot.lane.b32.xlu0 %v790, 95
    %v793 = vpop.permute.xlu0 %792
    %794 = vrot.lane.b32.xlu0 %v786, 95
    %v795 = vpop.permute.xlu0 %794
    %796 = vrot.lane.b32.xlu0 %v791, 95
    %v797 = vpop.permute.xlu0 %796
    %v798 = vsel %vm242, %v793, %v795
    %v799 = vsel %vm242, %v795, %v797
    %802 = vst [vmem:[#allocation3 + $0x60] sm:$0xf0] %v798
    %803 = vst [vmem:[#allocation3 + $0x68] sm:$0xf0] %v799
    %v804 = vld [vmem:[#allocation2] sm:$0xff]
    %v805 = vld [vmem:[#allocation2 + $0x8] sm:$0xf]
    %v808 = vcombine.high %v804, %v804
    %809 = vrot.lane.b32.xlu0 %v804, 94
    %v810 = vpop.permute.xlu0 %809
    %811 = vrot.lane.b32.xlu0 %v808, 94
    %v812 = vpop.permute.xlu0 %811
    %813 = vrot.lane.b32.xlu0 %v805, 94
    %v814 = vpop.permute.xlu0 %813
    %v815 = vsel %vm260, %v810, %v812
    %v816 = vsel %vm260, %v812, %v814
    %v819 = vsel %vm120, %v815, 0.0
    %v820 = vsel %vm121, %v816, 0.0
    %821 = vst [vmem:[#allocation3 + $0x80] sm:$0xf] %v819
    %822 = vst [vmem:[#allocation3 + $0x88] sm:$0xf] %v820
    %v825 = vcombine.low %v642, %v643
    %826 = vrot.lane.b32.xlu0 %v825, 17
    %v827 = vpop.permute.xlu0 %826
    %v828 = vrot.slane %v827, 4
    %v829 = vsel %vm76, %v828, %v827
    %832 = vst.msk [vmem:[#allocation2] sm:$0xff] %vm82, %v829
    %833 = vst.msk [vmem:[#allocation2 + $0x8] sm:$0xf] %vm68, %v828
    %v834 = vld [vmem:[#allocation2] sm:$0xff]
    %v836 = vcombine.high %v834, %v834
    %v838 = vsel %vm88, %v834, 0.0
    %v839 = vsel %vm89, %v836, 0.0
    %840 = vst [vmem:[#allocation3 + $0x10] sm:$0xf] %v838
    %841 = vst [vmem:[#allocation3 + $0x18] sm:$0xf] %v839
    %v842 = vld [vmem:[#allocation2] sm:$0xff]
    %v843 = vld [vmem:[#allocation2 + $0x8] sm:$0xf]
    %v846 = vcombine.low %v842, %v842
    %v847 = vcombine.low %v843, %v843
    %848 = vrot.lane.b32.xlu0 %v846, 127
    %v849 = vpop.permute.xlu0 %848
    %850 = vrot.lane.b32.xlu0 %v842, 127
    %v851 = vpop.permute.xlu0 %850
    %852 = vrot.lane.b32.xlu0 %v847, 127
    %v853 = vpop.permute.xlu0 %852
    %v854 = vsel %vm109, %v849, %v851
    %v855 = vsel %vm109, %v851, %v853
    %858 = vst [vmem:[#allocation3 + $0x10] sm:$0xf0] %v854
    %859 = vst [vmem:[#allocation3 + $0x18] sm:$0xf0] %v855
    %v860 = vld [vmem:[#allocation2] sm:$0xff]
    %v861 = vld [vmem:[#allocation2 + $0x8] sm:$0xf]
    %v864 = vcombine.high %v860, %v860
    %865 = vrot.lane.b32.xlu0 %v860, 126
    %v866 = vpop.permute.xlu0 %865
    %867 = vrot.lane.b32.xlu0 %v864, 126
    %v868 = vpop.permute.xlu0 %867
    %869 = vrot.lane.b32.xlu0 %v861, 126
    %v870 = vpop.permute.xlu0 %869
    %v871 = vsel %vm131, %v866, %v868
    %v872 = vsel %vm131, %v868, %v870
    %v875 = vsel %vm120, %v871, 0.0
    %v876 = vsel %vm121, %v872, 0.0
    %877 = vst [vmem:[#allocation3 + $0x30] sm:$0xf] %v875
    %878 = vst [vmem:[#allocation3 + $0x38] sm:$0xf] %v876
    %v879 = vld [vmem:[#allocation2] sm:$0xff]
    %v880 = vld [vmem:[#allocation2 + $0x8] sm:$0xf]
    %v883 = vcombine.high %v879, %v879
    %884 = vrot.lane.b32.xlu0 %v879, 112
    %v885 = vpop.permute.xlu0 %884
    %886 = vrot.lane.b32.xlu0 %v883, 112
    %v887 = vpop.permute.xlu0 %886
    %888 = vrot.lane.b32.xlu0 %v880, 112
    %v889 = vpop.permute.xlu0 %888
    %v890 = vsel %vm151, %v885, %v887
    %v891 = vsel %vm151, %v887, %v889
    %v894 = vsel %vm88, %v890, 0.0
    %v895 = vsel %vm89, %v891, 0.0
    %v898 = vrot.slane %v894, 4
    %v899 = vrot.slane %v895, 4
    %902 = vst [vmem:[#allocation3 + $0x30] sm:$0xf0] %v898
    %903 = vst [vmem:[#allocation3 + $0x38] sm:$0xf0] %v899
    %v904 = vld [vmem:[#allocation2] sm:$0xff]
    %v905 = vld [vmem:[#allocation2 + $0x8] sm:$0xf]
    %v908 = vcombine.high %v904, %v904
    %909 = vrot.lane.b32.xlu0 %v904, 111
    %v910 = vpop.permute.xlu0 %909
    %911 = vrot.lane.b32.xlu0 %v908, 111
    %v912 = vpop.permute.xlu0 %911
    %913 = vrot.lane.b32.xlu0 %v905, 111
    %v914 = vpop.permute.xlu0 %913
    %v915 = vsel %vm177, %v910, %v912
    %v916 = vsel %vm177, %v912, %v914
    %919 = vst [vmem:[#allocation3 + $0x50] sm:$0xf] %v915
    %920 = vst [vmem:[#allocation3 + $0x58] sm:$0xf] %v916
    %v921 = vld [vmem:[#allocation2] sm:$0xff]
    %v922 = vld [vmem:[#allocation2 + $0x8] sm:$0xf]
    %v925 = vcombine.high %v921, %v921
    %926 = vrot.lane.b32.xlu0 %v921, 110
    %v927 = vpop.permute.xlu0 %926
    %928 = vrot.lane.b32.xlu0 %v925, 110
    %v929 = vpop.permute.xlu0 %928
    %930 = vrot.lane.b32.xlu0 %v922, 110
    %v931 = vpop.permute.xlu0 %930
    %v932 = vsel %vm195, %v927, %v929
    %v933 = vsel %vm195, %v929, %v931
    %v936 = vsel %vm120, %v932, 0.0
    %v937 = vsel %vm121, %v933, 0.0
    %v940 = vrot.slane %v936, 4
    %v941 = vrot.slane %v937, 4
    %944 = vst [vmem:[#allocation3 + $0x50] sm:$0xf0] %v940
    %945 = vst [vmem:[#allocation3 + $0x58] sm:$0xf0] %v941
    %v946 = vld [vmem:[#allocation2] sm:$0xff]
    %v947 = vld [vmem:[#allocation2 + $0x8] sm:$0xf]
    %v950 = vcombine.high %v946, %v946
    %951 = vrot.lane.b32.xlu0 %v946, 96
    %v952 = vpop.permute.xlu0 %951
    %953 = vrot.lane.b32.xlu0 %v950, 96
    %v954 = vpop.permute.xlu0 %953
    %955 = vrot.lane.b32.xlu0 %v947, 96
    %v956 = vpop.permute.xlu0 %955
    %v957 = vsel %vm221, %v952, %v954
    %v958 = vsel %vm221, %v954, %v956
    %v961 = vsel %vm88, %v957, 0.0
    %v962 = vsel %vm89, %v958, 0.0
    %963 = vst [vmem:[#allocation3 + $0x70] sm:$0xf] %v961
    %964 = vst [vmem:[#allocation3 + $0x78] sm:$0xf] %v962
    %v965 = vld [vmem:[#allocation2] sm:$0xff]
    %v966 = vld [vmem:[#allocation2 + $0x8] sm:$0xf]
    %v969 = vcombine.low %v965, %v965
    %v970 = vcombine.low %v966, %v966
    %971 = vrot.lane.b32.xlu0 %v969, 95
    %v972 = vpop.permute.xlu0 %971
    %973 = vrot.lane.b32.xlu0 %v965, 95
    %v974 = vpop.permute.xlu0 %973
    %975 = vrot.lane.b32.xlu0 %v970, 95
    %v976 = vpop.permute.xlu0 %975
    %v977 = vsel %vm242, %v972, %v974
    %v978 = vsel %vm242, %v974, %v976
    %981 = vst [vmem:[#allocation3 + $0x70] sm:$0xf0] %v977
    %982 = vst [vmem:[#allocation3 + $0x78] sm:$0xf0] %v978
    %v983 = vld [vmem:[#allocation2] sm:$0xff]
    %v984 = vld [vmem:[#allocation2 + $0x8] sm:$0xf]
    %v987 = vcombine.high %v983, %v983
    %988 = vrot.lane.b32.xlu0 %v983, 94
    %v989 = vpop.permute.xlu0 %988
    %990 = vrot.lane.b32.xlu0 %v987, 94
    %v991 = vpop.permute.xlu0 %990
    %992 = vrot.lane.b32.xlu0 %v984, 94
    %v993 = vpop.permute.xlu0 %992
    %v994 = vsel %vm260, %v989, %v991
    %v995 = vsel %vm260, %v991, %v993
    %v998 = vsel %vm120, %v994, 0.0
    %v999 = vsel %vm121, %v995, 0.0
    %1000 = vst [vmem:[#allocation3 + $0x90] sm:$0xf] %v998
    %1001 = vst [vmem:[#allocation3 + $0x98] sm:$0xf] %v999
    %v1002 = vld [vmem:[%s3] sm:$0xf]
    %v1003 = vld [vmem:[#allocation3] sm:$0xff]
    %v1004 = vld [vmem:[#allocation3 + $0x8] sm:$0xff]
    %v1005 = vld [vmem:[#allocation3 + $0x10] sm:$0xff]
    %v1006 = vld [vmem:[#allocation3 + $0x18] sm:$0xff]
    %v1007 = vld [vmem:[#allocation3 + $0x20] sm:$0xff]
    %v1008 = vld [vmem:[#allocation3 + $0x28] sm:$0xff]
    %v1009 = vld [vmem:[#allocation3 + $0x30] sm:$0xff]
    %v1010 = vld [vmem:[#allocation3 + $0x38] sm:$0xff]
    %v1011 = vld [vmem:[#allocation3 + $0x40] sm:$0xff]
    %v1012 = vld [vmem:[#allocation3 + $0x48] sm:$0xff]
    %v1013 = vld [vmem:[#allocation3 + $0x50] sm:$0xff]
    %v1014 = vld [vmem:[#allocation3 + $0x58] sm:$0xff]
    %v1015 = vld [vmem:[#allocation3 + $0x60] sm:$0xff]
    %v1016 = vld [vmem:[#allocation3 + $0x68] sm:$0xff]
    %v1017 = vld [vmem:[#allocation3 + $0x70] sm:$0xff]
    %v1018 = vld [vmem:[#allocation3 + $0x78] sm:$0xff]
    %v1019 = vld [vmem:[#allocation3 + $0x80] sm:$0xf]
    %v1020 = vld [vmem:[#allocation3 + $0x88] sm:$0xf]
    %v1021 = vld [vmem:[#allocation3 + $0x90] sm:$0xf]
    %v1022 = vld [vmem:[#allocation3 + $0x98] sm:$0xf]
    %v1023 = vld [vmem:[%s4] sm:$0xf]
    %1025 = vset.pattern.permute.xlu0 0
    %1026 = vperm.xlu0 %1025, %v1023
    %v1027 = vpop.permute.xlu0 %1026
    %v1030 = vsel %vm473, %v1002, 0
    %v1033 = vsel %vm477, %v1019, 0
    %v1036 = vsel %vm477, %v1020, 0
    %v1039 = vsel %vm477, %v1021, 0
    %v1042 = vsel %vm477, %v1022, 0
    %1044 = vmatprep.subr.mxu0 %v1004
    %1045 = vmatpush1.msra.mxu0 %v1003
    %1046 = vmatprep.subr.mxu0 %v1008
    %1047 = vmatpush1.msra.mxu0 %v1007
    %1048 = vmatprep.subr.mxu0 %v1012
    %1049 = vmatpush1.msra.mxu0 %v1011
    %1050 = vmatprep.subr.mxu0 %v1016
    %1051 = vmatpush1.msra.mxu0 %v1015
    %1052 = vmatprep.subr.mxu0 %v1036
    %1053 = vmatpush1.msra.mxu0 %v1033
    %1054 = vmatprep.subr.mxu0 0.0
    %1055 = vmatpush1.msra.mxu0 0.0
    %1056 = vmatprep.subr.mxu0 0.0
    %1057 = vmatpush1.msra.mxu0 0.0
    %1058 = vmatprep.subr.mxu0 0.0
    %1059 = vmatpush1.msra.mxu0 0.0
    %1060 = vmatprep.subr.mxu0 0.0
    %1061 = vmatpush1.msra.mxu0 0.0
    %1062 = vmatprep.subr.mxu0 0.0
    %1063 = vmatpush1.msra.mxu0 0.0
    %1064 = vmatprep.subr.mxu0 0.0
    %1065 = vmatpush1.msra.mxu0 0.0
    %1066 = vmatprep.subr.mxu0 0.0
    %1067 = vmatpush1.msra.mxu0 0.0
    %1068 = vmatprep.subr.mxu0 0.0
    %1069 = vmatpush1.msra.mxu0 0.0
    %1070 = vmatprep.subr.mxu0 0.0
    %1071 = vmatpush1.msra.mxu0 0.0
    %1072 = vmatprep.subr.mxu0 0.0
    %1073 = vmatpush1.msra.mxu0 0.0
    %1074 = vmatprep.subr.mxu0 0.0
    %1075 = vmatpush1.msra.mxu0 0.0
    %1076 = vmatprep.subr.mxu0 0.0
    %1077 = vmatpush1.msra.mxu0 0.0
    %1078 = vmatprep.subr.mxu0 0.0
    %1079 = vmatpush1.msra.mxu0 0.0
    %1080 = vmatprep.subr.mxu0 0.0
    %1081 = vmatpush1.msra.mxu0 0.0
    %1082 = vmatprep.subr.mxu0 0.0
    %1083 = vmatpush1.msra.mxu0 0.0
    %1084 = vmatprep.subr.mxu0 0.0
    %1085 = vmatpush1.msra.mxu0 0.0
    %1086 = vmatprep.subr.mxu0 0.0
    %1087 = vmatpush1.msra.mxu0 0.0
    %1088 = vmatprep.subr.mxu0 0.0
    %1089 = vmatpush1.msra.mxu0 0.0
    %1090 = vmatprep.subr.mxu0 0.0
    %1091 = vmatpush1.msra.mxu0 0.0
    %1092 = vmatprep.subr.mxu0 0.0
    %1093 = vmatpush1.msra.mxu0 0.0
    %1094 = vmatprep.subr.mxu0 0.0
    %1095 = vmatpush1.msra.mxu0 0.0
    %1096 = vmatprep.subr.mxu0 0.0
    %1097 = vmatpush1.msra.mxu0 0.0
    %1098 = vmatprep.subr.mxu0 0.0
    %1099 = vmatpush1.msra.mxu0 0.0
    %1100 = vmatprep.subr.mxu0 0.0
    %1101 = vmatpush1.msra.mxu0 0.0
    %1102 = vmatprep.subr.mxu0 0.0
    %1103 = vmatpush1.msra.mxu0 0.0
    %1104 = vmatprep.subr.mxu0 0.0
    %1105 = vmatpush1.msra.mxu0 0.0
    %1106 = vmatprep.subr.mxu0 0.0
    %1107 = vmatpush1.msra.mxu0 0.0
    %1108 = vmatprep.mubr.f32.mxu0 0.0
    %1109 = vmatmul.mubr.f32.gmra.mrb[0].mxu0 %v1030
    %v1110 = vpop.f32.mrb[0].mxu0
    %v1111 = vadd.f32 %v1027, %v1110
    %v1112 = vpop.f32.mrb[0].mxu0
    %v1113 = vadd.f32 %v1027, %v1112
    %1114 = vdwg.mxu0
    %1115 = vmatprep.subr.mxu0 %v1006
    %1116 = vmatpush1.msra.mxu0 %v1005
    %1117 = vmatprep.subr.mxu0 %v1010
    %1118 = vmatpush1.msra.mxu0 %v1009
    %1119 = vmatprep.subr.mxu0 %v1014
    %1120 = vmatpush1.msra.mxu0 %v1013
    %1121 = vmatprep.subr.mxu0 %v1018
    %1122 = vmatpush1.msra.mxu0 %v1017
    %1123 = vmatprep.subr.mxu0 %v1042
    %1124 = vmatpush1.msra.mxu0 %v1039
    %1125 = vmatprep.subr.mxu0 0.0
    %1126 = vmatpush1.msra.mxu0 0.0
    %1127 = vmatprep.subr.mxu0 0.0
    %1128 = vmatpush1.msra.mxu0 0.0
    %1129 = vmatprep.subr.mxu0 0.0
    %1130 = vmatpush1.msra.mxu0 0.0
    %1131 = vmatprep.subr.mxu0 0.0
    %1132 = vmatpush1.msra.mxu0 0.0
    %1133 = vmatprep.subr.mxu0 0.0
    %1134 = vmatpush1.msra.mxu0 0.0
    %1135 = vmatprep.subr.mxu0 0.0
    %1136 = vmatpush1.msra.mxu0 0.0
    %1137 = vmatprep.subr.mxu0 0.0
    %1138 = vmatpush1.msra.mxu0 0.0
    %1139 = vmatprep.subr.mxu0 0.0
    %1140 = vmatpush1.msra.mxu0 0.0
    %1141 = vmatprep.subr.mxu0 0.0
    %1142 = vmatpush1.msra.mxu0 0.0
    %1143 = vmatprep.subr.mxu0 0.0
    %1144 = vmatpush1.msra.mxu0 0.0
    %1145 = vmatprep.subr.mxu0 0.0
    %1146 = vmatpush1.msra.mxu0 0.0
    %1147 = vmatprep.subr.mxu0 0.0
    %1148 = vmatpush1.msra.mxu0 0.0
    %1149 = vmatprep.subr.mxu0 0.0
    %1150 = vmatpush1.msra.mxu0 0.0
    %1151 = vmatprep.subr.mxu0 0.0
    %1152 = vmatpush1.msra.mxu0 0.0
    %1153 = vmatprep.subr.mxu0 0.0
    %1154 = vmatpush1.msra.mxu0 0.0
    %1155 = vmatprep.subr.mxu0 0.0
    %1156 = vmatpush1.msra.mxu0 0.0
    %1157 = vmatprep.subr.mxu0 0.0
    %1158 = vmatpush1.msra.mxu0 0.0
    %1159 = vmatprep.subr.mxu0 0.0
    %1160 = vmatpush1.msra.mxu0 0.0
    %1161 = vmatprep.subr.mxu0 0.0
    %1162 = vmatpush1.msra.mxu0 0.0
    %1163 = vmatprep.subr.mxu0 0.0
    %1164 = vmatpush1.msra.mxu0 0.0
    %1165 = vmatprep.subr.mxu0 0.0
    %1166 = vmatpush1.msra.mxu0 0.0
    %1167 = vmatprep.subr.mxu0 0.0
    %1168 = vmatpush1.msra.mxu0 0.0
    %1169 = vmatprep.subr.mxu0 0.0
    %1170 = vmatpush1.msra.mxu0 0.0
    %1171 = vmatprep.subr.mxu0 0.0
    %1172 = vmatpush1.msra.mxu0 0.0
    %1173 = vmatprep.subr.mxu0 0.0
    %1174 = vmatpush1.msra.mxu0 0.0
    %1175 = vmatprep.subr.mxu0 0.0
    %1176 = vmatpush1.msra.mxu0 0.0
    %1177 = vmatprep.subr.mxu0 0.0
    %1178 = vmatpush1.msra.mxu0 0.0
    %1179 = vmatprep.mubr.f32.mxu0 0.0
    %1180 = vmatmul.mubr.f32.gmra.mrb[0].mxu0 %v1030
    %v1181 = vpop.f32.mrb[0].mxu0
    %v1182 = vadd.f32 %v1027, %v1181
    %v1183 = vpop.f32.mrb[0].mxu0
    %v1184 = vadd.f32 %v1027, %v1183
    %1185 = vdwg.mxu0
    %v1186 = vcombine.high %v35, %v35
    %v1188 = vadd.f32 %v1111, %v35
    %v1189 = vadd.f32 %v1113, %v1186
    %v1192 = vcombine.low %v1188, %v1189
    %1194 = vst [vmem:[#allocation7] sm:$0xff] %v1192
    %v1195 = vcombine.high %v36, %v36
    %v1197 = vadd.f32 %v1182, %v36
    %v1198 = vadd.f32 %v1184, %v1195
    %v1201 = vcombine.low %v1197, %v1198
    %s1203 = scalar_lea.vmem [#allocation7], 8
    %1204 = vst [vmem:[%s1203] sm:$0xff] %v1201
    // Predicated region
    $region26: #{tpu_custom_call.1} parent=1 // pred_check
      _
    $region27: #{tpu_custom_call.1} parent=1 // pred_check_branch
      %1206 = sbr.rel (0) target = $region29
    $region28: #{tpu_custom_call.1} parent=1 // pred_region
      %s1208 = ssub.s32 256, 256
      %1209 = vsyncadd [#allocation6], %s1208
      %s1210 = sshll.u32 [#allocation7], 4
      %s1211 = int_to_ptr.vmem [resolvable:$true] %s1210
      %1216 = dma.vmem_to_hbm [thread:$0]  %s1211, 256, %s5, [#allocation6], 128, 128, 8
    $region29: #{tpu_custom_call.1} parent=1 // pred_fallthru
      _
    // Predicated region
    $region30: #{tpu_custom_call.1} parent=1 // pred_check
      _
    $region31: #{tpu_custom_call.1} parent=1 // pred_check_branch
      %1218 = sbr.rel (0) target = $region33
    $region32: #{tpu_custom_call.1} parent=1 // pred_region
      %1219 = dma.done [#allocation6], 256
    $region33: #{tpu_custom_call.1} parent=1 // pred_fallthru
      _
    %1220 = vsyncpa [#allocation5], 1
    %1221 = vsyncpa [#allocation6], 1

</llo_original>
